<compile_context>
chip_gen: v7x
topology: tpu7x:2x2x1
jax: 0.10.0
libtpu: 0.0.40
codegen_flags: <defaults>
</compile_context>

<pallas_src>
import functools
from collections import OrderedDict

import numpy as np
import jax
import jax.numpy as jnp
from jax.experimental import pallas as pl
from jax.experimental.pallas import tpu as pltpu

vgg_layer = {'conv_1_1': 0, 'conv_1_2': 2, 'pool_1': 4, 'conv_2_1': 5, 'conv_2_2': 7,
             'pool_2': 9, 'conv_3_1': 10, 'conv_3_2': 12, 'conv_3_3': 14, 'conv_3_4': 16,
             'pool_3': 18, 'conv_4_1': 19, 'conv_4_2': 21, 'conv_4_3': 23, 'conv_4_4': 25,
             'pool_4': 27, 'conv_5_1': 28, 'conv_5_2': 30, 'conv_5_3': 32, 'conv_5_4': 34,
             'pool_5': 36}
vgg_layer_inv = {v: k for k, v in vgg_layer.items()}

# VGG19 'features' configuration (conv output channels, 'M' = 2x2 max pool).
_VGG19_CFG = [64, 64, 'M', 128, 128, 'M', 256, 256, 256, 256, 'M',
              512, 512, 512, 512, 'M', 512, 512, 512, 512, 'M']

ACT_DTYPE = jnp.bfloat16          # activation / weight (MXU operand) dtype
_VMEM_LIMIT = 48 * 1024 * 1024    # fits v5e/v6e (128 MiB) and v7x (64 MiB) physical VMEM

# pltpu.CompilerParams was named TPUCompilerParams in older JAX releases.
_CompilerParams = getattr(pltpu, "CompilerParams", None) or getattr(pltpu, "TPUCompilerParams", None)


def _compiler_params():
    if _CompilerParams is None:
        return None
    try:
        return _CompilerParams(dimension_semantics=("parallel", "parallel"),
                               vmem_limit_bytes=_VMEM_LIMIT)
    except TypeError:  # very old signature without vmem_limit_bytes
        return _CompilerParams(dimension_semantics=("parallel", "parallel"))


def _build_layer_list():
    layers = []
    cin = 3
    for v in _VGG19_CFG:
        if v == 'M':
            layers.append(('pool',))
        else:
            layers.append(('conv', cin, v))
            layers.append(('relu',))
            cin = v
    return layers


def _largest_divisor_leq(n, cap):
    for t in range(min(n, cap), 0, -1):
        if n % t == 0:
            return t
    return 1


# ----------------------------- conv kernel ----------------------------------

def _conv3x3_kernel(*refs, th, relu_fuse, norm_fuse):
    """3x3 conv, stride 1, zero pad 1, fused bias (+optional input-norm, +optional ReLU).

    refs (norm_fuse): x, scale, shift, w, b, o     else: x, w, b, o
      x : (1, H, W, Cin)        full-height image slab (resident across the h-tile sweep)
      w : (G, Kg, Cout)         packed taps; G=1 -> Kg=9*Cin (single deep matmul, RGB layer),
                                G=3 -> Kg=3*Cin (one matmul per ky row of taps)
      b : (1, Cout) f32
      o : (1, th, W, Cout)
    """
    if norm_fuse:
        x_ref, scale_ref, shift_ref, w_ref, b_ref, o_ref = refs
    else:
        x_ref, w_ref, b_ref, o_ref = refs
        scale_ref = shift_ref = None

    _, H, W, Cin = x_ref.shape
    Cout = o_ref.shape[3]
    G = w_ref.shape[0]
    cdt = w_ref.dtype                      # compute dtype (bf16)

    h = pl.program_id(1)
    r0 = h * th                            # first output row of this tile

    def load_rows(start, nrows):
        v = x_ref[0, pl.ds(start, nrows)]                       # (nrows, W, Cin)
        if norm_fuse:
            # ((x+1)/2 - mean)/std  ==  x*scale + shift  (applied before zero padding)
            v = v.astype(jnp.float32) * scale_ref[...] + shift_ref[...]
        return v.astype(cdt)

    center = load_rows(r0, th)                                  # rows r0 .. r0+th-1
    prev = load_rows(jnp.maximum(r0 - 1, 0), 1)                 # row r0-1 (or masked to 0)
    nxt = load_rows(jnp.minimum(r0 + th, H - 1), 1)             # row r0+th (or masked to 0)
    prev = jnp.where(r0 == 0, jnp.zeros_like(prev), prev)
    nxt = jnp.where(r0 + th >= H, jnp.zeros_like(nxt), nxt)

    # Zero-padded (th+2, W+2, Cin) halo strip, assembled entirely in VMEM.
    strip = jnp.concatenate([prev, center, nxt], axis=0)        # (th+2, W, Cin)
    zcol = jnp.zeros((th + 2, 1, Cin), cdt)
    wide = jnp.concatenate([zcol, strip, zcol], axis=1)         # (th+2, W+2, Cin)

    acc = jnp.zeros((th * W, Cout), jnp.float32)
    if G == 1:
        # all 9 taps in one K = 9*Cin matmul (used for the tiny-Cin RGB first conv: K=27)
        parts = [wide[ky:ky + th, kx:kx + W, :] for ky in range(3) for kx in range(3)]
        patch = jnp.concatenate(parts, axis=-1).reshape(th * W, 9 * Cin)
        acc = acc + jnp.dot(patch, w_ref[0], preferred_element_type=jnp.float32)
    else:
        # one K = 3*Cin matmul per ky row of taps
        for ky in range(3):
            parts = [wide[ky:ky + th, kx:kx + W, :] for kx in range(3)]
            patch = jnp.concatenate(parts, axis=-1).reshape(th * W, 3 * Cin)
            acc = acc + jnp.dot(patch, w_ref[ky], preferred_element_type=jnp.float32)

    acc = acc + b_ref[...]
    if relu_fuse:
        acc = jnp.maximum(acc, 0.0)
    o_ref[...] = acc.reshape(1, th, W, Cout).astype(o_ref.dtype)


def conv3x3(x, w_packed, b, norm_scale=None, norm_shift=None, *, apply_relu):
    N, H, W, Cin = x.shape
    G, Kg, Cout = w_packed.shape
    th = _largest_divisor_leq(H, 32)       # row tile: bounds the per-step working set
    norm_fuse = norm_scale is not None

    kernel = functools.partial(_conv3x3_kernel, th=th, relu_fuse=apply_relu,
                               norm_fuse=norm_fuse)

    in_specs = [pl.BlockSpec((1, H, W, Cin), lambda n, h: (n, 0, 0, 0))]
    args = [x]
    if norm_fuse:
        in_specs += [pl.BlockSpec((1, Cin), lambda n, h: (0, 0)),
                     pl.BlockSpec((1, Cin), lambda n, h: (0, 0))]
        args += [norm_scale, norm_shift]
    in_specs += [pl.BlockSpec((G, Kg, Cout), lambda n, h: (0, 0, 0)),
                 pl.BlockSpec((1, Cout), lambda n, h: (0, 0))]
    args += [w_packed, b]

    return pl.pallas_call(
        kernel,
        out_shape=jax.ShapeDtypeStruct((N, H, W, Cout), ACT_DTYPE),
        grid=(N, H // th),
        in_specs=in_specs,
        # NOTE: for the 64-channel block-1 layers the output lane width is 64 (< 128, full dim)
        # -> masked stores; deeper layers are lane-dense (128/256/512).
        out_specs=pl.BlockSpec((1, th, W, Cout), lambda n, h: (n, h, 0, 0)),
        compiler_params=_compiler_params(),
    )(*args)


# ----------------------------- maxpool kernel -------------------------------

def _maxpool2x2_kernel(x_ref, o_ref, *, c):
    # x_ref: (1, 2*tp, Wo, 2C) -- lane layout [C of even col | C of odd col]
    x = x_ref[0]
    m = jnp.maximum(x[0::2], x[1::2])                 # pool along H (leading dim)
    o_ref[0] = jnp.maximum(m[:, :, :c], m[:, :, c:])  # pool along W (lane halves)


def maxpool2x2(x):
    N, H, W, C = x.shape
    assert H % 2 == 0 and W % 2 == 0, "2x2 maxpool assumes even spatial dims (true for VGG)."
    Ho, Wo = H // 2, W // 2
    xr = x.reshape(N, H, Wo, 2 * C)                   # free row-major view, no HBM pass
    tp = _largest_divisor_leq(Ho, 64)
    kern = functools.partial(_maxpool2x2_kernel, c=C)
    return pl.pallas_call(
        kern,
        out_shape=jax.ShapeDtypeStruct((N, Ho, Wo, C), x.dtype),
        grid=(N, Ho // tp),
        in_specs=[pl.BlockSpec((1, 2 * tp, Wo, 2 * C), lambda n, t: (n, t, 0, 0))],
        out_specs=pl.BlockSpec((1, tp, Wo, C), lambda n, t: (n, t, 0, 0)),
        compiler_params=_compiler_params(),
    )(xr)


# ----------------------------- standalone ReLU ------------------------------
# Only used on the rare path where a listened *pool* forces a capture between a conv and its
# ReLU (so the ReLU cannot be fused into the conv epilogue).

def _relu_kernel(x_ref, o_ref):
    o_ref[...] = jnp.maximum(x_ref[...], 0.0)


def relu_op(x):
    N, H, W, C = x.shape
    tr = _largest_divisor_leq(H, 128)
    return pl.pallas_call(
        _relu_kernel,
        out_shape=jax.ShapeDtypeStruct(x.shape, x.dtype),
        grid=(N, H // tr),
        in_specs=[pl.BlockSpec((1, tr, W, C), lambda n, h: (n, h, 0, 0))],
        out_specs=pl.BlockSpec((1, tr, W, C), lambda n, h: (n, h, 0, 0)),
        compiler_params=_compiler_params(),
    )(x)


# ------------------------------- the module ---------------------------------

def _to_nchw_f32(x_nhwc):
    return jnp.transpose(x_nhwc, (0, 3, 1, 2)).astype(jnp.float32)


class VGGModelPallas:
    """Pallas/TPU equivalent of VGG_Model (synthetic deterministic weights)."""

    def __init__(self, listen_list, key):
        full_layers = _build_layer_list()
        last_needed = vgg_layer[listen_list[-1]]
        # Same truncation as the PyTorch module: keep layers 0 .. last_needed+1
        self.layers = full_layers[:last_needed + 2]
        self.listen = {vgg_layer[name] for name in listen_list}

        self.params = {}          # packed bf16 weights for the Pallas conv kernel
        self.master_params = {}   # f32 (bf16-rounded) HWIO weights for the pure-JAX reference
        for idx, layer in enumerate(self.layers):
            if layer[0] == 'conv':
                _, cin, cout = layer
                key, kw, kb = jax.random.split(key, 3)
                w = jax.random.normal(kw, (3, 3, cin, cout), jnp.float32)
                w = w * (2.0 / (9.0 * cin)) ** 0.5
                w = w.astype(ACT_DTYPE).astype(jnp.float32)      # same rounding as kernel path
                b = jax.random.normal(kb, (cout,), jnp.float32) * 0.01
                self.master_params[idx] = (w, b)
                if cin <= 8:                                     # RGB layer: single K=9*cin dot
                    w_packed = w.reshape(1, 9 * cin, cout)
                else:                                            # one K=3*cin dot per ky
                    w_packed = w.reshape(3, 3 * cin, cout)
                self.params[idx] = (w_packed.astype(ACT_DTYPE), b.reshape(1, cout))

        mean = jnp.array([0.485, 0.456, 0.406], jnp.float32)
        std = jnp.array([0.229, 0.224, 0.225], jnp.float32)
        # ((x+1)/2 - mean)/std  ==  x*scale + shift ; fused into the conv_1_1 kernel
        self.norm_scale = (0.5 / std).reshape(1, 3)
        self.norm_shift = ((0.5 - mean) / std).reshape(1, 3)

    def __call__(self, x_nchw):
        # NCHW (PyTorch input convention) -> NHWC for the kernels
        x = jnp.transpose(x_nchw, (0, 2, 3, 1)).astype(jnp.float32)

        features = OrderedDict()
        layers = self.layers
        n = len(layers)
        i = 0
        first_conv = True
        while i < n:
            kind = layers[i][0]
            if kind == 'conv':
                w, b = self.params[i]
                # Fuse the following ReLU unless the post-conv value itself must be captured
                # (capture after layer i happens when i-1 is a listened *pool*).
                fuse_relu = (i + 1 < n) and layers[i + 1][0] == 'relu' and ((i - 1) not in self.listen)
                if first_conv:
                    x = conv3x3(x, w, b, self.norm_scale, self.norm_shift, apply_relu=fuse_relu)
                    first_conv = False
                else:
                    x = conv3x3(x, w, b, apply_relu=fuse_relu)
                if fuse_relu:
                    # executed layers i (conv) and i+1 (relu) in one fused kernel
                    if i in self.listen:
                        features[vgg_layer_inv[i]] = _to_nchw_f32(x)
                    i += 2
                else:
                    if (i - 1) in self.listen:
                        features[vgg_layer_inv[i - 1]] = _to_nchw_f32(x)
                    i += 1
            elif kind == 'relu':
                x = relu_op(x)
                if (i - 1) in self.listen:
                    features[vgg_layer_inv[i - 1]] = _to_nchw_f32(x)
                i += 1
            else:  # 'pool'
                x = maxpool2x2(x)
                if (i - 1) in self.listen:
                    features[vgg_layer_inv[i - 1]] = _to_nchw_f32(x)
                i += 1
        return features


# ---------------------- pure-JAX reference (for checking) -------------------

def reference_forward(x_nchw, model):
    x = jnp.transpose(x_nchw, (0, 2, 3, 1)).astype(jnp.float32)
    x = x * model.norm_scale.reshape(1, 1, 1, 3) + model.norm_shift.reshape(1, 1, 1, 3)
    feats = OrderedDict()
    for i, layer in enumerate(model.layers):
        if layer[0] == 'conv':
            w, b = model.master_params[i]
            x = jax.lax.conv_general_dilated(
                x, w, window_strides=(1, 1), padding='SAME',
                dimension_numbers=('NHWC', 'HWIO', 'NHWC')) + b
        elif layer[0] == 'relu':
            x = jnp.maximum(x, 0.0)
        else:
            N, H, W, C = x.shape
            x = x.reshape(N, H // 2, 2, W // 2, 2, C).max(axis=(2, 4))
        if i - 1 in model.listen:
            feats[vgg_layer_inv[i - 1]] = jnp.transpose(x, (0, 3, 1, 2))
    return feats


if __name__ == "__main__":
    key = jax.random.PRNGKey(0)
    k_x, k_w = jax.random.split(key)

    # Small input consistent with the module: NCHW, 3 channels (mean/std are RGB)
    x = jax.random.uniform(k_x, (2, 3, 16, 16), jnp.float32, minval=-1.0, maxval=1.0)

    model = VGGModelPallas(listen_list=['conv_1_1', 'conv_1_2', 'conv_2_1'], key=k_w)
    feats = model(x)
    for v in feats.values():
        jax.block_until_ready(v)

    # Sanity check against a pure-JAX (f32) reference of the same module.
    ref = reference_forward(x, model)
    assert list(feats.keys()) == list(ref.keys())
    expected_shapes = {'conv_1_1': (2, 64, 16, 16),
                       'conv_1_2': (2, 64, 16, 16),
                       'conv_2_1': (2, 128, 8, 8)}
    for name in feats:
        a = np.asarray(feats[name], dtype=np.float32)
        b = np.asarray(ref[name], dtype=np.float32)
        assert a.shape == expected_shapes[name], (name, a.shape)
        assert np.allclose(a, b, rtol=1e-1, atol=2.5e-1), \
            (name, float(np.max(np.abs(a - b))))

    print("KERNEL_OK")
</pallas_src>

<mosaic_0001>
module attributes {stable_mosaic.version = 11 : i64} {
  func.func @_conv3x3_kernel(%arg0: i32, %arg1: i32, %arg2: memref<1x16x16x3xf32, #tpu.memory_space<vmem>>, %arg3: memref<1x3xf32, #tpu.memory_space<vmem>>, %arg4: memref<1x3xf32, #tpu.memory_space<vmem>>, %arg5: memref<1x27x64xbf16, #tpu.memory_space<vmem>>, %arg6: memref<1x64xf32, #tpu.memory_space<vmem>>, %arg7: memref<1x16x16x64xbf16, #tpu.memory_space<vmem>>) attributes {dimension_semantics = [#tpu.dimension_semantics<parallel>, #tpu.dimension_semantics<parallel>], iteration_bounds = array<i64: 2, 1>, scalar_prefetch = 0 : i64, scratch_operands = 0 : i64, tpu.core_type = #tpu.core_type<tc>, window_params = [{transform_indices = @transform_0, window_bounds = array<i64: 1, 16, 16, 3>}, {pipeline_mode = #tpu.pipeline_mode<synchronous>, transform_indices = @transform_1, window_bounds = array<i64: 1, 3>}, {pipeline_mode = #tpu.pipeline_mode<synchronous>, transform_indices = @transform_2, window_bounds = array<i64: 1, 3>}, {pipeline_mode = #tpu.pipeline_mode<synchronous>, transform_indices = @transform_3, window_bounds = array<i64: 1, 27, 64>}, {pipeline_mode = #tpu.pipeline_mode<synchronous>, transform_indices = @transform_4, window_bounds = array<i64: 1, 64>}, {transform_indices = @transform_5, window_bounds = array<i64: 1, 16, 16, 64>}]} {
    %c16_i32 = arith.constant 16 : i32
    %0 = arith.muli %arg1, %c16_i32 : i32
    %c0 = arith.constant 0 : index
    %1 = arith.index_cast %0 : i32 to index
    %c0_0 = arith.constant 0 : index
    %c0_1 = arith.constant 0 : index
    %2 = vector.load %arg2[%c0, %1, %c0_0, %c0_1] : memref<1x16x16x3xf32, #tpu.memory_space<vmem>>, vector<1x16x16x3xf32>
    %3 = vector.shape_cast %2 : vector<1x16x16x3xf32> to vector<16x16x3xf32>
    %c0_2 = arith.constant 0 : index
    %c0_3 = arith.constant 0 : index
    %4 = vector.load %arg3[%c0_2, %c0_3] : memref<1x3xf32, #tpu.memory_space<vmem>>, vector<1x3xf32>
    %5 = vector.shape_cast %4 : vector<1x3xf32> to vector<1x1x3xf32>
    %6 = vector.broadcast %5 : vector<1x1x3xf32> to vector<16x16x3xf32>
    %7 = arith.mulf %3, %6 : vector<16x16x3xf32>
    %c0_4 = arith.constant 0 : index
    %c0_5 = arith.constant 0 : index
    %8 = vector.load %arg4[%c0_4, %c0_5] : memref<1x3xf32, #tpu.memory_space<vmem>>, vector<1x3xf32>
    %9 = vector.shape_cast %8 : vector<1x3xf32> to vector<1x1x3xf32>
    %10 = vector.broadcast %9 : vector<1x1x3xf32> to vector<16x16x3xf32>
    %11 = arith.addf %7, %10 : vector<16x16x3xf32>
    %12 = arith.truncf %11 : vector<16x16x3xf32> to vector<16x16x3xbf16>
    %c1_i32 = arith.constant 1 : i32
    %13 = arith.subi %0, %c1_i32 : i32
    %c0_i32 = arith.constant 0 : i32
    %14 = arith.maxsi %13, %c0_i32 : i32
    %c0_6 = arith.constant 0 : index
    %15 = arith.index_cast %14 : i32 to index
    %c0_7 = arith.constant 0 : index
    %c0_8 = arith.constant 0 : index
    %16 = vector.load %arg2[%c0_6, %15, %c0_7, %c0_8] : memref<1x16x16x3xf32, #tpu.memory_space<vmem>>, vector<1x1x16x3xf32>
    %17 = vector.shape_cast %16 : vector<1x1x16x3xf32> to vector<1x16x3xf32>
    %c0_9 = arith.constant 0 : index
    %c0_10 = arith.constant 0 : index
    %18 = vector.load %arg3[%c0_9, %c0_10] : memref<1x3xf32, #tpu.memory_space<vmem>>, vector<1x3xf32>
    %19 = vector.shape_cast %18 : vector<1x3xf32> to vector<1x1x3xf32>
    %20 = vector.broadcast %19 : vector<1x1x3xf32> to vector<1x16x3xf32>
    %21 = arith.mulf %17, %20 : vector<1x16x3xf32>
    %c0_11 = arith.constant 0 : index
    %c0_12 = arith.constant 0 : index
    %22 = vector.load %arg4[%c0_11, %c0_12] : memref<1x3xf32, #tpu.memory_space<vmem>>, vector<1x3xf32>
    %23 = vector.shape_cast %22 : vector<1x3xf32> to vector<1x1x3xf32>
    %24 = vector.broadcast %23 : vector<1x1x3xf32> to vector<1x16x3xf32>
    %25 = arith.addf %21, %24 : vector<1x16x3xf32>
    %26 = arith.truncf %25 : vector<1x16x3xf32> to vector<1x16x3xbf16>
    %c16_i32_13 = arith.constant 16 : i32
    %27 = arith.addi %0, %c16_i32_13 : i32
    %c15_i32 = arith.constant 15 : i32
    %28 = arith.minsi %27, %c15_i32 : i32
    %c0_14 = arith.constant 0 : index
    %29 = arith.index_cast %28 : i32 to index
    %c0_15 = arith.constant 0 : index
    %c0_16 = arith.constant 0 : index
    %30 = vector.load %arg2[%c0_14, %29, %c0_15, %c0_16] : memref<1x16x16x3xf32, #tpu.memory_space<vmem>>, vector<1x1x16x3xf32>
    %31 = vector.shape_cast %30 : vector<1x1x16x3xf32> to vector<1x16x3xf32>
    %c0_17 = arith.constant 0 : index
    %c0_18 = arith.constant 0 : index
    %32 = vector.load %arg3[%c0_17, %c0_18] : memref<1x3xf32, #tpu.memory_space<vmem>>, vector<1x3xf32>
    %33 = vector.shape_cast %32 : vector<1x3xf32> to vector<1x1x3xf32>
    %34 = vector.broadcast %33 : vector<1x1x3xf32> to vector<1x16x3xf32>
    %35 = arith.mulf %31, %34 : vector<1x16x3xf32>
    %c0_19 = arith.constant 0 : index
    %c0_20 = arith.constant 0 : index
    %36 = vector.load %arg4[%c0_19, %c0_20] : memref<1x3xf32, #tpu.memory_space<vmem>>, vector<1x3xf32>
    %37 = vector.shape_cast %36 : vector<1x3xf32> to vector<1x1x3xf32>
    %38 = vector.broadcast %37 : vector<1x1x3xf32> to vector<1x16x3xf32>
    %39 = arith.addf %35, %38 : vector<1x16x3xf32>
    %40 = arith.truncf %39 : vector<1x16x3xf32> to vector<1x16x3xbf16>
    %c0_i32_21 = arith.constant 0 : i32
    %41 = arith.cmpi eq, %0, %c0_i32_21 : i32
    %cst = arith.constant 0.000000e+00 : bf16
    %42 = vector.broadcast %cst : bf16 to vector<1x16x3xbf16>
    %43 = arith.select %41, %42, %26 : vector<1x16x3xbf16>
    %c16_i32_22 = arith.constant 16 : i32
    %44 = arith.addi %0, %c16_i32_22 : i32
    %c16_i32_23 = arith.constant 16 : i32
    %45 = arith.cmpi sge, %44, %c16_i32_23 : i32
    %cst_24 = arith.constant 0.000000e+00 : bf16
    %46 = vector.broadcast %cst_24 : bf16 to vector<1x16x3xbf16>
    %47 = arith.select %45, %46, %40 : vector<1x16x3xbf16>
    %48 = tpu.concatenate %43, %12, %47 in 0 : vector<1x16x3xbf16>, vector<16x16x3xbf16>, vector<1x16x3xbf16> -> vector<18x16x3xbf16>
    %cst_25 = arith.constant 0.000000e+00 : bf16
    %49 = vector.broadcast %cst_25 : bf16 to vector<18x1x3xbf16>
    %50 = tpu.concatenate %49, %48, %49 in 1 : vector<18x1x3xbf16>, vector<18x16x3xbf16>, vector<18x1x3xbf16> -> vector<18x18x3xbf16>
    %cst_26 = arith.constant 0.000000e+00 : f32
    %51 = vector.broadcast %cst_26 : f32 to vector<256x64xf32>
    %52 = vector.extract_strided_slice %50 {offsets = [0, 0, 0], sizes = [16, 16, 3], strides = [1, 1, 1]} : vector<18x18x3xbf16> to vector<16x16x3xbf16>
    %53 = vector.extract_strided_slice %50 {offsets = [0, 1, 0], sizes = [16, 16, 3], strides = [1, 1, 1]} : vector<18x18x3xbf16> to vector<16x16x3xbf16>
    %54 = vector.extract_strided_slice %50 {offsets = [0, 2, 0], sizes = [16, 16, 3], strides = [1, 1, 1]} : vector<18x18x3xbf16> to vector<16x16x3xbf16>
    %55 = vector.extract_strided_slice %50 {offsets = [1, 0, 0], sizes = [16, 16, 3], strides = [1, 1, 1]} : vector<18x18x3xbf16> to vector<16x16x3xbf16>
    %56 = vector.extract_strided_slice %50 {offsets = [1, 1, 0], sizes = [16, 16, 3], strides = [1, 1, 1]} : vector<18x18x3xbf16> to vector<16x16x3xbf16>
    %57 = vector.extract_strided_slice %50 {offsets = [1, 2, 0], sizes = [16, 16, 3], strides = [1, 1, 1]} : vector<18x18x3xbf16> to vector<16x16x3xbf16>
    %58 = vector.extract_strided_slice %50 {offsets = [2, 0, 0], sizes = [16, 16, 3], strides = [1, 1, 1]} : vector<18x18x3xbf16> to vector<16x16x3xbf16>
    %59 = vector.extract_strided_slice %50 {offsets = [2, 1, 0], sizes = [16, 16, 3], strides = [1, 1, 1]} : vector<18x18x3xbf16> to vector<16x16x3xbf16>
    %60 = vector.extract_strided_slice %50 {offsets = [2, 2, 0], sizes = [16, 16, 3], strides = [1, 1, 1]} : vector<18x18x3xbf16> to vector<16x16x3xbf16>
    %61 = tpu.concatenate %52, %53, %54, %55, %56, %57, %58, %59, %60 in 2 : vector<16x16x3xbf16>, vector<16x16x3xbf16>, vector<16x16x3xbf16>, vector<16x16x3xbf16>, vector<16x16x3xbf16>, vector<16x16x3xbf16>, vector<16x16x3xbf16>, vector<16x16x3xbf16>, vector<16x16x3xbf16> -> vector<16x16x27xbf16>
    %62 = vector.shape_cast %61 : vector<16x16x27xbf16> to vector<256x27xbf16>
    %c0_27 = arith.constant 0 : index
    %c0_28 = arith.constant 0 : index
    %c0_29 = arith.constant 0 : index
    %63 = vector.load %arg5[%c0_27, %c0_28, %c0_29] : memref<1x27x64xbf16, #tpu.memory_space<vmem>>, vector<1x27x64xbf16>
    %64 = vector.shape_cast %63 : vector<1x27x64xbf16> to vector<27x64xbf16>
    %cst_30 = arith.constant dense<0.000000e+00> : vector<256x64xf32>
    %65 = tpu.matmul %62, %64, %cst_30 {dimension_numbers = #tpu.dot_dimension_numbers<[1], [0], [0], [1], [0, 0, 1, 1], [], []>} : vector<256x27xbf16>, vector<27x64xbf16>, vector<256x64xf32> -> vector<256x64xf32>
    %66 = arith.addf %51, %65 : vector<256x64xf32>
    %c0_31 = arith.constant 0 : index
    %c0_32 = arith.constant 0 : index
    %67 = vector.load %arg6[%c0_31, %c0_32] : memref<1x64xf32, #tpu.memory_space<vmem>>, vector<1x64xf32>
    %68 = vector.broadcast %67 : vector<1x64xf32> to vector<256x64xf32>
    %69 = arith.addf %66, %68 : vector<256x64xf32>
    %cst_33 = arith.constant 0.000000e+00 : f32
    %70 = vector.broadcast %cst_33 : f32 to vector<256x64xf32>
    %71 = arith.maximumf %69, %70 : vector<256x64xf32>
    %72 = vector.shape_cast %71 : vector<256x64xf32> to vector<1x16x16x64xf32>
    %73 = arith.truncf %72 : vector<1x16x16x64xf32> to vector<1x16x16x64xbf16>
    %c0_34 = arith.constant 0 : index
    %c0_35 = arith.constant 0 : index
    %c0_36 = arith.constant 0 : index
    %c0_37 = arith.constant 0 : index
    %74 = vector.load %arg7[%c0_34, %c0_35, %c0_36, %c0_37] : memref<1x16x16x64xbf16, #tpu.memory_space<vmem>>, vector<1x16x16x64xbf16>
    tpu.vector_store %arg7[%c0_34, %c0_35, %c0_36, %c0_37], %73 {strides = array<i32>} : memref<1x16x16x64xbf16, #tpu.memory_space<vmem>>, vector<1x16x16x64xbf16>,
    return
  }
  func.func @transform_0(%arg0: i32, %arg1: i32) -> (i32, i32, i32, i32) {
    %c0_i32 = arith.constant 0 : i32
    %c0_i32_0 = arith.constant 0 : i32
    %c0_i32_1 = arith.constant 0 : i32
    %c0_i32_2 = arith.constant 0 : i32
    return %arg0, %c0_i32, %c0_i32_0, %c0_i32_1 : i32, i32, i32, i32
  }
  func.func @transform_1(%arg0: i32, %arg1: i32) -> (i32, i32) {
    %c0_i32 = arith.constant 0 : i32
    %c0_i32_0 = arith.constant 0 : i32
    %c0_i32_1 = arith.constant 0 : i32
    return %c0_i32, %c0_i32_0 : i32, i32
  }
  func.func @transform_2(%arg0: i32, %arg1: i32) -> (i32, i32) {
    %c0_i32 = arith.constant 0 : i32
    %c0_i32_0 = arith.constant 0 : i32
    %c0_i32_1 = arith.constant 0 : i32
    return %c0_i32, %c0_i32_0 : i32, i32
  }
  func.func @transform_3(%arg0: i32, %arg1: i32) -> (i32, i32, i32) {
    %c0_i32 = arith.constant 0 : i32
    %c0_i32_0 = arith.constant 0 : i32
    %c0_i32_1 = arith.constant 0 : i32
    %c0_i32_2 = arith.constant 0 : i32
    return %c0_i32, %c0_i32_0, %c0_i32_1 : i32, i32, i32
  }
  func.func @transform_4(%arg0: i32, %arg1: i32) -> (i32, i32) {
    %c0_i32 = arith.constant 0 : i32
    %c0_i32_0 = arith.constant 0 : i32
    %c0_i32_1 = arith.constant 0 : i32
    return %c0_i32, %c0_i32_0 : i32, i32
  }
  func.func @transform_5(%arg0: i32, %arg1: i32) -> (i32, i32, i32, i32) {
    %c0_i32 = arith.constant 0 : i32
    %c0_i32_0 = arith.constant 0 : i32
    %c0_i32_1 = arith.constant 0 : i32
    return %arg0, %arg1, %c0_i32, %c0_i32_0 : i32, i32, i32, i32
  }
}

</mosaic_0001>

<llo_original>
// kernel: tpu_custom_call.1
$region0: #{tpu_custom_call.1}
  #allocation0 [shape = 'u32[]', space=smem, size = 0x4, offset = 0x4, fixed_abs, tag = 'smem constant byte address 0x4 - core index']
  #allocation1 [shape = 'u32[144,128]{1,0:T(1,128)}', space=vmem, size = 0x12000, scoped, tag = 'internal scratch']
  %s0 = inlined_call_operand.vmem [shape: f32[2,16,16,3], index: 0, kind: input, shape index: {}]
  %s1 = inlined_call_operand.vmem [shape: f32[1,3], index: 1, kind: input, shape index: {}]
  %s2 = inlined_call_operand.vmem [shape: f32[1,3], index: 2, kind: input, shape index: {}]
  %s3 = inlined_call_operand.vmem [shape: bf16[1,27,64], index: 3, kind: input, shape index: {}]
  %s4 = inlined_call_operand.vmem [shape: f32[1,64], index: 4, kind: input, shape index: {}]
  %s5 = inlined_call_operand.hbm [shape: bf16[2,16,16,64], index: 5, kind: output, shape index: {}]
  %s6 = sld [smem:[#allocation0]]
  $region53: #{tpu_custom_call.1} parent=0
    _
  %s8 = ssub.s32 1, %s6
  %s9 = scalar_select 0, %s8, %s6
  $region1: #{tpu_custom_call.1} parent=0
    #allocation2 [shape = 'u8[131072]{0}', space=vmem, size = 0x20000, scoped, tag = 'output window, operand 0']
    #allocation3 [shape = 's32[2]{0}', space=sflag, size = 0x8, scoped, tag = 'scoped memory for tpu_custom_call.1']
    %10 = vsyncpa [#allocation3], 0
    %s11 = scalar_lea.sflag [#allocation3], 1
    %12 = vsyncpa %s11, 0
    loop: start=0, step=1, limit=4
    $region2: #{tpu_custom_call.1} parent=1 // loop_pre_header
      _
    $region3: #{tpu_custom_call.1} parent=1 // loop_header
      %s14 = sphi 0, %s18
      %p15 = scmp.ge.s32.totalorder %s14, 4
      %s21 = sphi 0, %s33
      %s22 = sphi 0, %s29
      %s23 = sphi 0, %s21
      %s24 = sphi 0, %s22
      %s25 = sphi 0, %s23
      %s26 = sphi 0, %s24
      %s36 = sphi 0, %s38
      %s39 = sphi 0, %s36
      %s40 = sphi 0, %s39
      %s56 = sphi 0, %s40
      %s60 = sphi 0, %s60
      %s62 = sphi 0, %s60
      %s63 = sphi 0, %s62
      %s77 = sphi 0, %s63
      %s81 = sphi 0, %s81
      %s83 = sphi 0, %s81
      %s84 = sphi 0, %s83
      %s98 = sphi 0, %s84
      %s102 = sphi 0, %s102
      %s104 = sphi 0, %s102
      %s105 = sphi 0, %s104
      %s119 = sphi 0, %s105
      %s123 = sphi 0, %s123
      %s125 = sphi 0, %s123
      %s126 = sphi 0, %s125
      %s140 = sphi 0, %s126
      %s148 = sphi 0, %s150
      %s151 = sphi 0, %s148
      %s152 = sphi 0, %s151
      %s168 = sphi 0, %s152
    $region4: #{tpu_custom_call.1} parent=1 // loop_header_branch
      %17 = sbr.rel (%p15) target = $region8
    $region5: #{tpu_custom_call.1} parent=1 // loop_body
      %s19 = ssub.s32 %s14, 1
      %s20 = ssub.s32 %s14, 2
      %s27 = sadd.s32 1, %s22
      %p28 = scmp.ge.s32.totalorder %s27, 1
      %s29 = scalar_select %p28, 0, %s27
      %s30 = sadd.s32 1, %s21
      %s31 = scalar_select %p28, %s30, %s21
      %p32 = scmp.ge.s32.totalorder %s31, 2
      %s33 = scalar_select %p32, 0, %s31
      %s34 = ssub.s32 %s21, %s33
      %p35 = scmp.eq.s32.totalorder %s34, 0
      %s37 = sadd.s32 %s36, 1
      %s38 = scalar_select %p35, %s36, %s37
      %p41 = pneg %p35
      %p42 = scmp.eq.s32.totalorder %s14, 1
      %p43 = por %p41, %p42
      %p44 = scmp.ne.s32.totalorder %s36, %s39
      %p45 = scmp.eq.s32.totalorder %s14, 0
      %p46 = por %p44, %p45
      %p47 = scmp.ne.s32.totalorder %s36, %s39
      %p48 = scmp.eq.s32.totalorder %s19, 1
      %p49 = por %p47, %p48
      %p50 = scmp.ne.s32.totalorder %s39, %s40
      %p51 = scmp.eq.s32.totalorder %s19, 0
      %p52 = por %p50, %p51
      %p53 = scmp.ne.s32.totalorder %s39, %s40
      %p54 = scmp.eq.s32.totalorder %s20, 1
      %p55 = por %p53, %p54
      %p57 = scmp.ne.s32.totalorder %s40, %s56
      %p58 = scmp.eq.s32.totalorder %s20, 0
      %p59 = por %p57, %p58
      %s61 = sadd.s32 %s60, 1
      %p64 = scmp.eq.s32.totalorder %s14, 1
      %p65 = scmp.ne.s32.totalorder %s60, %s62
      %p66 = scmp.eq.s32.totalorder %s14, 0
      %p67 = por %p65, %p66
      %p68 = scmp.ne.s32.totalorder %s60, %s62
      %p69 = scmp.eq.s32.totalorder %s19, 1
      %p70 = por %p68, %p69
      %p71 = scmp.ne.s32.totalorder %s62, %s63
      %p72 = scmp.eq.s32.totalorder %s19, 0
      %p73 = por %p71, %p72
      %p74 = scmp.ne.s32.totalorder %s62, %s63
      %p75 = scmp.eq.s32.totalorder %s20, 1
      %p76 = por %p74, %p75
      %p78 = scmp.ne.s32.totalorder %s63, %s77
      %p79 = scmp.eq.s32.totalorder %s20, 0
      %p80 = por %p78, %p79
      %s82 = sadd.s32 %s81, 1
      %p85 = scmp.eq.s32.totalorder %s14, 1
      %p86 = scmp.ne.s32.totalorder %s81, %s83
      %p87 = scmp.eq.s32.totalorder %s14, 0
      %p88 = por %p86, %p87
      %p89 = scmp.ne.s32.totalorder %s81, %s83
      %p90 = scmp.eq.s32.totalorder %s19, 1
      %p91 = por %p89, %p90
      %p92 = scmp.ne.s32.totalorder %s83, %s84
      %p93 = scmp.eq.s32.totalorder %s19, 0
      %p94 = por %p92, %p93
      %p95 = scmp.ne.s32.totalorder %s83, %s84
      %p96 = scmp.eq.s32.totalorder %s20, 1
      %p97 = por %p95, %p96
      %p99 = scmp.ne.s32.totalorder %s84, %s98
      %p100 = scmp.eq.s32.totalorder %s20, 0
      %p101 = por %p99, %p100
      %s103 = sadd.s32 %s102, 1
      %p106 = scmp.eq.s32.totalorder %s14, 1
      %p107 = scmp.ne.s32.totalorder %s102, %s104
      %p108 = scmp.eq.s32.totalorder %s14, 0
      %p109 = por %p107, %p108
      %p110 = scmp.ne.s32.totalorder %s102, %s104
      %p111 = scmp.eq.s32.totalorder %s19, 1
      %p112 = por %p110, %p111
      %p113 = scmp.ne.s32.totalorder %s104, %s105
      %p114 = scmp.eq.s32.totalorder %s19, 0
      %p115 = por %p113, %p114
      %p116 = scmp.ne.s32.totalorder %s104, %s105
      %p117 = scmp.eq.s32.totalorder %s20, 1
      %p118 = por %p116, %p117
      %p120 = scmp.ne.s32.totalorder %s105, %s119
      %p121 = scmp.eq.s32.totalorder %s20, 0
      %p122 = por %p120, %p121
      %s124 = sadd.s32 %s123, 1
      %p127 = scmp.eq.s32.totalorder %s14, 1
      %p128 = scmp.ne.s32.totalorder %s123, %s125
      %p129 = scmp.eq.s32.totalorder %s14, 0
      %p130 = por %p128, %p129
      %p131 = scmp.ne.s32.totalorder %s123, %s125
      %p132 = scmp.eq.s32.totalorder %s19, 1
      %p133 = por %p131, %p132
      %p134 = scmp.ne.s32.totalorder %s125, %s126
      %p135 = scmp.eq.s32.totalorder %s19, 0
      %p136 = por %p134, %p135
      %p137 = scmp.ne.s32.totalorder %s125, %s126
      %p138 = scmp.eq.s32.totalorder %s20, 1
      %p139 = por %p137, %p138
      %p141 = scmp.ne.s32.totalorder %s126, %s140
      %p142 = scmp.eq.s32.totalorder %s20, 0
      %p143 = por %p141, %p142
      %s144 = ssub.s32 %s21, %s33
      %s145 = ssub.s32 %s22, %s29
      %s146 = sor.u32 %s144, %s145
      %p147 = scmp.eq.s32.totalorder %s146, 0
      %s149 = sadd.s32 %s148, 1
      %s150 = scalar_select %p147, %s148, %s149
      %p153 = pneg %p147
      %p154 = scmp.eq.s32.totalorder %s14, 1
      %p155 = por %p153, %p154
      %p156 = scmp.ne.s32.totalorder %s148, %s151
      %p157 = scmp.eq.s32.totalorder %s14, 0
      %p158 = por %p156, %p157
      %p159 = scmp.ne.s32.totalorder %s148, %s151
      %p160 = scmp.eq.s32.totalorder %s19, 1
      %p161 = por %p159, %p160
      %p162 = scmp.ne.s32.totalorder %s151, %s152
      %p163 = scmp.eq.s32.totalorder %s19, 0
      %p164 = por %p162, %p163
      %p165 = scmp.ne.s32.totalorder %s151, %s152
      %p166 = scmp.eq.s32.totalorder %s20, 1
      %p167 = por %p165, %p166
      %p169 = scmp.ne.s32.totalorder %s152, %s168
      %p170 = scmp.eq.s32.totalorder %s20, 0
      %p171 = por %p169, %p170
      %p172 = scmp.le.s32.totalorder 1, %s14
      %p173 = scmp.lt.s32.totalorder %s14, 3
      %p174 = pnand %p172, %p173
      %p175 = pneg %p174
      // Predicated region
      $region9: #{tpu_custom_call.1} parent=5 // pred_check
        _
      $region10: #{tpu_custom_call.1} parent=5 // pred_check_branch
        %177 = sbr.rel (%p174) target = $region12
      $region11: #{tpu_custom_call.1} parent=5 // pred_region
        %s178 = ssub.s32 %s14, 1
        // Predicated region
        $region13: #{tpu_custom_call.1} parent=11 // pred_check
          %p179 = pneg %p73
        $region14: #{tpu_custom_call.1} parent=11 // pred_check_branch
          %181 = sbr.rel (%p179) target = $region16
        $region15: #{tpu_custom_call.1} parent=11 // pred_region
          _
        $region16: #{tpu_custom_call.1} parent=11 // pred_fallthru
          _
        // Predicated region
        $region17: #{tpu_custom_call.1} parent=11 // pred_check
          %p182 = pneg %p94
        $region18: #{tpu_custom_call.1} parent=11 // pred_check_branch
          %184 = sbr.rel (%p182) target = $region20
        $region19: #{tpu_custom_call.1} parent=11 // pred_region
          _
        $region20: #{tpu_custom_call.1} parent=11 // pred_fallthru
          _
        // Predicated region
        $region21: #{tpu_custom_call.1} parent=11 // pred_check
          %p185 = pneg %p115
        $region22: #{tpu_custom_call.1} parent=11 // pred_check_branch
          %187 = sbr.rel (%p185) target = $region24
        $region23: #{tpu_custom_call.1} parent=11 // pred_region
          _
        $region24: #{tpu_custom_call.1} parent=11 // pred_fallthru
          _
        // Predicated region
        $region25: #{tpu_custom_call.1} parent=11 // pred_check
          %p188 = pneg %p136
        $region26: #{tpu_custom_call.1} parent=11 // pred_check_branch
          %190 = sbr.rel (%p188) target = $region28
        $region27: #{tpu_custom_call.1} parent=11 // pred_region
          _
        $region28: #{tpu_custom_call.1} parent=11 // pred_fallthru
          _
      $region12: #{tpu_custom_call.1} parent=5 // pred_fallthru
        _
      %p191 = scmp.lt.s32.totalorder %s14, 2
      // Predicated region
      $region29: #{tpu_custom_call.1} parent=5 // pred_check
        %p192 = pneg %p191
      $region30: #{tpu_custom_call.1} parent=5 // pred_check_branch
        %194 = sbr.rel (%p192) target = $region32
      $region31: #{tpu_custom_call.1} parent=5 // pred_region
        // Predicated region
        $region33: #{tpu_custom_call.1} parent=31 // pred_check
          %p195 = pneg %p46
        $region34: #{tpu_custom_call.1} parent=31 // pred_check_branch
          %197 = sbr.rel (%p195) target = $region36
        $region35: #{tpu_custom_call.1} parent=31 // pred_region
          %p198 = scmp.lt.s32.totalorder %s21, 1
          %s199 = scalar_select %p198, %s21, 1
          %s200 = smul.addr %s199, 32
          %s201 = smul.addr %s200, 8
          %s202 = scalar_lea.vmem %s0, %s201
        $region36: #{tpu_custom_call.1} parent=31 // pred_fallthru
          _
      $region32: #{tpu_custom_call.1} parent=5 // pred_fallthru
        _
      %p203 = scmp.le.s32.totalorder 1, %s14
      %p204 = scmp.lt.s32.totalorder %s14, 3
      %p205 = pnand %p203, %p204
      %p206 = pneg %p205
      // Predicated region
      $region37: #{tpu_custom_call.1} parent=5 // pred_check
        _
      $region38: #{tpu_custom_call.1} parent=5 // pred_check_branch
        %208 = sbr.rel (%p205) target = $region40
      $region39: #{tpu_custom_call.1} parent=5 // pred_region
        %s209 = ssub.s32 %s14, 1
        %p210 = scmp.lt.s32.totalorder %s23, 1
        %s211 = scalar_select %p210, %s23, 1
        %s212 = smul.addr %s211, 32
        %s213 = smul.addr %s212, 8
        %s214 = scalar_lea.vmem %s0, %s213
        %p215 = pneg %p52
        %p216 = pneg %p49
        %p217 = pneg %p73
        %p218 = pneg %p70
        %p219 = pneg %p94
        %p220 = pneg %p91
        %p221 = pneg %p115
        %p222 = pneg %p112
        %p223 = pneg %p136
        %p224 = pneg %p133
        %p225 = pneg %p164
        %p226 = pneg %p161
        %s227 = sand.u32 %s151, 1
        %s228 = scalar_lea.sflag [#allocation3], %s227
        %s229 = sand.u32 %s151, 1
        %s230 = smul.addr %s229, 128
        %s231 = scalar_lea.vmem [#allocation2], %s230
        %p232 = scmp.lt.s32.totalorder %s23, 1
        %s233 = scalar_select %p232, %s23, 1
        %s234 = smul.addr %s233, 32
        %s235 = smul.addr %s234, 8
        %s236 = scalar_lea.vmem %s0, %s235
        %s237 = smul.u32 16, %s24
        %s239 = smul.u32 %s24, 16
        %s240 = smul.u32 %s239, 16
        %s241 = scalar_lea.vmem %s236, %s240
        %v242 = vld [vmem:[%s241] sm:$0xff]
        %v243 = vld [vmem:[%s241 + $0x8] sm:$0xff]
        %v244 = vld [vmem:[%s241 + $0x10] sm:$0xff]
        %v245 = vld [vmem:[%s241 + $0x18] sm:$0xff]
        %v246 = vld [vmem:[%s241 + $0x20] sm:$0xff]
        %v247 = vld [vmem:[%s241 + $0x28] sm:$0xff]
        %v248 = vld [vmem:[%s241 + $0x30] sm:$0xff]
        %v249 = vld [vmem:[%s241 + $0x38] sm:$0xff]
        %v250 = vld [vmem:[%s241 + $0x40] sm:$0xff]
        %v251 = vld [vmem:[%s241 + $0x48] sm:$0xff]
        %v252 = vld [vmem:[%s241 + $0x50] sm:$0xff]
        %v253 = vld [vmem:[%s241 + $0x58] sm:$0xff]
        %v254 = vld [vmem:[%s241 + $0x60] sm:$0xff]
        %v255 = vld [vmem:[%s241 + $0x68] sm:$0xff]
        %v256 = vld [vmem:[%s241 + $0x70] sm:$0xff]
        %v257 = vld [vmem:[%s241 + $0x78] sm:$0xff]
        %v258 = vld [vmem:[%s241 + $0x80] sm:$0xff]
        %v259 = vld [vmem:[%s241 + $0x88] sm:$0xff]
        %v260 = vld [vmem:[%s241 + $0x90] sm:$0xff]
        %v261 = vld [vmem:[%s241 + $0x98] sm:$0xff]
        %v262 = vld [vmem:[%s241 + $0xa0] sm:$0xff]
        %v263 = vld [vmem:[%s241 + $0xa8] sm:$0xff]
        %v264 = vld [vmem:[%s241 + $0xb0] sm:$0xff]
        %v265 = vld [vmem:[%s241 + $0xb8] sm:$0xff]
        %v266 = vld [vmem:[%s241 + $0xc0] sm:$0xff]
        %v267 = vld [vmem:[%s241 + $0xc8] sm:$0xff]
        %v268 = vld [vmem:[%s241 + $0xd0] sm:$0xff]
        %v269 = vld [vmem:[%s241 + $0xd8] sm:$0xff]
        %v270 = vld [vmem:[%s241 + $0xe0] sm:$0xff]
        %v271 = vld [vmem:[%s241 + $0xe8] sm:$0xff]
        %v272 = vld [vmem:[%s241 + $0xf0] sm:$0xff]
        %v273 = vld [vmem:[%s241 + $0xf8] sm:$0xff]
        %v274 = vld [vmem:[%s1] sm:$0x1]
        %v276 = vlaneseq
        %v277 = vshrl.u32 %v276, 7
        %v278 = vsub.s32 0, %v277
        %v279 = vrot.slane %v274, %v278
        %v281 = vmul.f32 %v242, %v279
        %v282 = vmul.f32 %v243, %v279
        %v283 = vmul.f32 %v244, %v279
        %v284 = vmul.f32 %v245, %v279
        %v285 = vmul.f32 %v246, %v279
        %v286 = vmul.f32 %v247, %v279
        %v287 = vmul.f32 %v248, %v279
        %v288 = vmul.f32 %v249, %v279
        %v289 = vmul.f32 %v250, %v279
        %v290 = vmul.f32 %v251, %v279
        %v291 = vmul.f32 %v252, %v279
        %v292 = vmul.f32 %v253, %v279
        %v293 = vmul.f32 %v254, %v279
        %v294 = vmul.f32 %v255, %v279
        %v295 = vmul.f32 %v256, %v279
        %v296 = vmul.f32 %v257, %v279
        %v297 = vmul.f32 %v258, %v279
        %v298 = vmul.f32 %v259, %v279
        %v299 = vmul.f32 %v260, %v279
        %v300 = vmul.f32 %v261, %v279
        %v301 = vmul.f32 %v262, %v279
        %v302 = vmul.f32 %v263, %v279
        %v303 = vmul.f32 %v264, %v279
        %v304 = vmul.f32 %v265, %v279
        %v305 = vmul.f32 %v266, %v279
        %v306 = vmul.f32 %v267, %v279
        %v307 = vmul.f32 %v268, %v279
        %v308 = vmul.f32 %v269, %v279
        %v309 = vmul.f32 %v270, %v279
        %v310 = vmul.f32 %v271, %v279
        %v311 = vmul.f32 %v272, %v279
        %v312 = vmul.f32 %v273, %v279
        %v313 = vld [vmem:[%s2] sm:$0x1]
        %v315 = vlaneseq
        %v316 = vshrl.u32 %v315, 7
        %v317 = vsub.s32 0, %v316
        %v318 = vrot.slane %v313, %v317
        %v320 = vadd.f32 %v281, %v318
        %v321 = vadd.f32 %v282, %v318
        %v322 = vadd.f32 %v283, %v318
        %v323 = vadd.f32 %v284, %v318
        %v324 = vadd.f32 %v285, %v318
        %v325 = vadd.f32 %v286, %v318
        %v326 = vadd.f32 %v287, %v318
        %v327 = vadd.f32 %v288, %v318
        %v328 = vadd.f32 %v289, %v318
        %v329 = vadd.f32 %v290, %v318
        %v330 = vadd.f32 %v291, %v318
        %v331 = vadd.f32 %v292, %v318
        %v332 = vadd.f32 %v293, %v318
        %v333 = vadd.f32 %v294, %v318
        %v334 = vadd.f32 %v295, %v318
        %v335 = vadd.f32 %v296, %v318
        %v336 = vadd.f32 %v297, %v318
        %v337 = vadd.f32 %v298, %v318
        %v338 = vadd.f32 %v299, %v318
        %v339 = vadd.f32 %v300, %v318
        %v340 = vadd.f32 %v301, %v318
        %v341 = vadd.f32 %v302, %v318
        %v342 = vadd.f32 %v303, %v318
        %v343 = vadd.f32 %v304, %v318
        %v344 = vadd.f32 %v305, %v318
        %v345 = vadd.f32 %v306, %v318
        %v346 = vadd.f32 %v307, %v318
        %v347 = vadd.f32 %v308, %v318
        %v348 = vadd.f32 %v309, %v318
        %v349 = vadd.f32 %v310, %v318
        %v350 = vadd.f32 %v311, %v318
        %v351 = vadd.f32 %v312, %v318
        %v352 = vpack.c.bf16 %v321, %v320
        %v353 = vpack.c.bf16 %v323, %v322
        %v354 = vpack.c.bf16 %v325, %v324
        %v355 = vpack.c.bf16 %v327, %v326
        %v356 = vpack.c.bf16 %v329, %v328
        %v357 = vpack.c.bf16 %v331, %v330
        %v358 = vpack.c.bf16 %v333, %v332
        %v359 = vpack.c.bf16 %v335, %v334
        %v360 = vpack.c.bf16 %v337, %v336
        %v361 = vpack.c.bf16 %v339, %v338
        %v362 = vpack.c.bf16 %v341, %v340
        %v363 = vpack.c.bf16 %v343, %v342
        %v364 = vpack.c.bf16 %v345, %v344
        %v365 = vpack.c.bf16 %v347, %v346
        %v366 = vpack.c.bf16 %v349, %v348
        %v367 = vpack.c.bf16 %v351, %v350
        %s368 = ssub.s32 %s239, 1
        %p369 = scmp.gt.s32.totalorder %s368, 0
        %s370 = scalar_select %p369, %s368, 0
        %s371 = smul.u32 %s370, 16
        %s372 = scalar_lea.vmem %s236, %s371
        %v373 = vld [vmem:[%s372] sm:$0xff]
        %v374 = vld [vmem:[%s372 + $0x8] sm:$0xff]
        %v375 = vmul.f32 %v373, %v279
        %v376 = vmul.f32 %v374, %v279
        %v377 = vadd.f32 %v375, %v318
        %v378 = vadd.f32 %v376, %v318
        %v379 = vpack.c.bf16 %v378, %v377
        %s380 = sadd.s32 %s239, 16
        %p381 = scmp.lt.s32.totalorder %s380, 15
        %s382 = scalar_select %p381, %s380, 15
        %s383 = smul.u32 %s382, 16
        %s384 = scalar_lea.vmem %s236, %s383
        %v385 = vld [vmem:[%s384] sm:$0xff]
        %v386 = vld [vmem:[%s384 + $0x8] sm:$0xff]
        %v387 = vmul.f32 %v385, %v279
        %v388 = vmul.f32 %v386, %v279
        %v389 = vadd.f32 %v387, %v318
        %v390 = vadd.f32 %v388, %v318
        %v391 = vpack.c.bf16 %v390, %v389
        %p392 = scmp.eq.s32.totalorder %s239, 0
        %s393 = scalar_select %p392, 1, 0
        %v394 = vstv %s393
        %vm395 = vcmp.eq.s32.totalorder %v394, 1
        %v396 = vsel %vm395, 0, %v379
        %p397 = scmp.ge.s32.totalorder %s380, 16
        %s398 = scalar_select %p397, 1, 0
        %v399 = vstv %s398
        %vm400 = vcmp.eq.s32.totalorder %v399, 1
        %v401 = vsel %vm400, 0, %v391
        %v403 = vshrl.u32 %v396, 16
        %v405 = vrot.slane %v403, 7
        %v406 = vshll.u32 %v396, 16
        %v408 = vor.u32 %v405, %v406
        %v410 = vshrl.u32 %v352, 16
        %v412 = vrot.slane %v410, 7
        %v413 = vshll.u32 %v352, 16
        %v415 = vor.u32 %v412, %v413
        %v417 = vshrl.u32 %v353, 16
        %v419 = vrot.slane %v417, 7
        %v420 = vshll.u32 %v353, 16
        %v422 = vor.u32 %v419, %v420
        %v424 = vshrl.u32 %v354, 16
        %v426 = vrot.slane %v424, 7
        %v427 = vshll.u32 %v354, 16
        %v429 = vor.u32 %v426, %v427
        %v431 = vshrl.u32 %v355, 16
        %v433 = vrot.slane %v431, 7
        %v434 = vshll.u32 %v355, 16
        %v436 = vor.u32 %v433, %v434
        %v438 = vshrl.u32 %v356, 16
        %v440 = vrot.slane %v438, 7
        %v441 = vshll.u32 %v356, 16
        %v443 = vor.u32 %v440, %v441
        %v445 = vshrl.u32 %v357, 16
        %v447 = vrot.slane %v445, 7
        %v448 = vshll.u32 %v357, 16
        %v450 = vor.u32 %v447, %v448
        %v452 = vshrl.u32 %v358, 16
        %v454 = vrot.slane %v452, 7
        %v455 = vshll.u32 %v358, 16
        %v457 = vor.u32 %v454, %v455
        %v459 = vshrl.u32 %v359, 16
        %v461 = vrot.slane %v459, 7
        %v462 = vshll.u32 %v359, 16
        %v464 = vor.u32 %v461, %v462
        %v466 = vshrl.u32 %v360, 16
        %v468 = vrot.slane %v466, 7
        %v469 = vshll.u32 %v360, 16
        %v471 = vor.u32 %v468, %v469
        %v473 = vshrl.u32 %v361, 16
        %v475 = vrot.slane %v473, 7
        %v476 = vshll.u32 %v361, 16
        %v478 = vor.u32 %v475, %v476
        %v480 = vshrl.u32 %v362, 16
        %v482 = vrot.slane %v480, 7
        %v483 = vshll.u32 %v362, 16
        %v485 = vor.u32 %v482, %v483
        %v487 = vshrl.u32 %v363, 16
        %v489 = vrot.slane %v487, 7
        %v490 = vshll.u32 %v363, 16
        %v492 = vor.u32 %v489, %v490
        %v494 = vshrl.u32 %v364, 16
        %v496 = vrot.slane %v494, 7
        %v497 = vshll.u32 %v364, 16
        %v499 = vor.u32 %v496, %v497
        %v501 = vshrl.u32 %v365, 16
        %v503 = vrot.slane %v501, 7
        %v504 = vshll.u32 %v365, 16
        %v506 = vor.u32 %v503, %v504
        %v508 = vshrl.u32 %v366, 16
        %v510 = vrot.slane %v508, 7
        %v511 = vshll.u32 %v366, 16
        %v513 = vor.u32 %v510, %v511
        %v515 = vshrl.u32 %v367, 16
        %v517 = vrot.slane %v515, 7
        %v518 = vshll.u32 %v367, 16
        %v520 = vor.u32 %v517, %v518
        %v522 = vshrl.u32 %v401, 16
        %v524 = vrot.slane %v522, 7
        %v525 = vshll.u32 %v401, 16
        %v527 = vor.u32 %v524, %v525
        %vm564 = vcmask 1040384
        %vm565 = vsmask.f32 256
        %vm566 = vmand %vm564, %vm565
        %v567 = vsel %vm566, 0, %v408
        %v568 = vsel %vm566, 0, %v415
        %v569 = vsel %vm566, 0, %v422
        %v570 = vsel %vm566, 0, %v429
        %v571 = vsel %vm566, 0, %v436
        %v572 = vsel %vm566, 0, %v443
        %v573 = vsel %vm566, 0, %v450
        %v574 = vsel %vm566, 0, %v457
        %v575 = vsel %vm566, 0, %v464
        %v576 = vsel %vm566, 0, %v471
        %v577 = vsel %vm566, 0, %v478
        %v578 = vsel %vm566, 0, %v485
        %v579 = vsel %vm566, 0, %v492
        %v580 = vsel %vm566, 0, %v499
        %v581 = vsel %vm566, 0, %v506
        %v582 = vsel %vm566, 0, %v513
        %v583 = vsel %vm566, 0, %v520
        %v584 = vsel %vm566, 0, %v527
        %v585 = vsel %vm566, %v405, 0
        %v586 = vsel %vm566, %v412, 0
        %v587 = vsel %vm566, %v419, 0
        %v588 = vsel %vm566, %v426, 0
        %v589 = vsel %vm566, %v433, 0
        %v590 = vsel %vm566, %v440, 0
        %v591 = vsel %vm566, %v447, 0
        %v592 = vsel %vm566, %v454, 0
        %v593 = vsel %vm566, %v461, 0
        %v594 = vsel %vm566, %v468, 0
        %v595 = vsel %vm566, %v475, 0
        %v596 = vsel %vm566, %v482, 0
        %v597 = vsel %vm566, %v489, 0
        %v598 = vsel %vm566, %v496, 0
        %v599 = vsel %vm566, %v503, 0
        %v600 = vsel %vm566, %v510, 0
        %v601 = vsel %vm566, %v517, 0
        %v602 = vsel %vm566, %v524, 0
        %vm603 = vsmask.f32 7424
        %v605 = vshrl.u32 %v567, 16
        %v607 = vshll.u32 %v567, 16
        %v609 = vrot.slane %v607, 1
        %v610 = vor.u32 %v605, %v609
        %v612 = vshll.u32 %v585, 16
        %v614 = vrot.slane %v612, 1
        %v615 = vsel %vm603, %v610, %v614
        %v617 = vshrl.u32 %v568, 16
        %v619 = vshll.u32 %v568, 16
        %v621 = vrot.slane %v619, 1
        %v622 = vor.u32 %v617, %v621
        %v624 = vshll.u32 %v586, 16
        %v626 = vrot.slane %v624, 1
        %v627 = vsel %vm603, %v622, %v626
        %v629 = vshrl.u32 %v569, 16
        %v631 = vshll.u32 %v569, 16
        %v633 = vrot.slane %v631, 1
        %v634 = vor.u32 %v629, %v633
        %v636 = vshll.u32 %v587, 16
        %v638 = vrot.slane %v636, 1
        %v639 = vsel %vm603, %v634, %v638
        %v641 = vshrl.u32 %v570, 16
        %v643 = vshll.u32 %v570, 16
        %v645 = vrot.slane %v643, 1
        %v646 = vor.u32 %v641, %v645
        %v648 = vshll.u32 %v588, 16
        %v650 = vrot.slane %v648, 1
        %v651 = vsel %vm603, %v646, %v650
        %v653 = vshrl.u32 %v571, 16
        %v655 = vshll.u32 %v571, 16
        %v657 = vrot.slane %v655, 1
        %v658 = vor.u32 %v653, %v657
        %v660 = vshll.u32 %v589, 16
        %v662 = vrot.slane %v660, 1
        %v663 = vsel %vm603, %v658, %v662
        %v665 = vshrl.u32 %v572, 16
        %v667 = vshll.u32 %v572, 16
        %v669 = vrot.slane %v667, 1
        %v670 = vor.u32 %v665, %v669
        %v672 = vshll.u32 %v590, 16
        %v674 = vrot.slane %v672, 1
        %v675 = vsel %vm603, %v670, %v674
        %v677 = vshrl.u32 %v573, 16
        %v679 = vshll.u32 %v573, 16
        %v681 = vrot.slane %v679, 1
        %v682 = vor.u32 %v677, %v681
        %v684 = vshll.u32 %v591, 16
        %v686 = vrot.slane %v684, 1
        %v687 = vsel %vm603, %v682, %v686
        %v689 = vshrl.u32 %v574, 16
        %v691 = vshll.u32 %v574, 16
        %v693 = vrot.slane %v691, 1
        %v694 = vor.u32 %v689, %v693
        %v696 = vshll.u32 %v592, 16
        %v698 = vrot.slane %v696, 1
        %v699 = vsel %vm603, %v694, %v698
        %v701 = vshrl.u32 %v575, 16
        %v703 = vshll.u32 %v575, 16
        %v705 = vrot.slane %v703, 1
        %v706 = vor.u32 %v701, %v705
        %v708 = vshll.u32 %v593, 16
        %v710 = vrot.slane %v708, 1
        %v711 = vsel %vm603, %v706, %v710
        %v713 = vshrl.u32 %v576, 16
        %v715 = vshll.u32 %v576, 16
        %v717 = vrot.slane %v715, 1
        %v718 = vor.u32 %v713, %v717
        %v720 = vshll.u32 %v594, 16
        %v722 = vrot.slane %v720, 1
        %v723 = vsel %vm603, %v718, %v722
        %v725 = vshrl.u32 %v577, 16
        %v727 = vshll.u32 %v577, 16
        %v729 = vrot.slane %v727, 1
        %v730 = vor.u32 %v725, %v729
        %v732 = vshll.u32 %v595, 16
        %v734 = vrot.slane %v732, 1
        %v735 = vsel %vm603, %v730, %v734
        %v737 = vshrl.u32 %v578, 16
        %v739 = vshll.u32 %v578, 16
        %v741 = vrot.slane %v739, 1
        %v742 = vor.u32 %v737, %v741
        %v744 = vshll.u32 %v596, 16
        %v746 = vrot.slane %v744, 1
        %v747 = vsel %vm603, %v742, %v746
        %v749 = vshrl.u32 %v579, 16
        %v751 = vshll.u32 %v579, 16
        %v753 = vrot.slane %v751, 1
        %v754 = vor.u32 %v749, %v753
        %v756 = vshll.u32 %v597, 16
        %v758 = vrot.slane %v756, 1
        %v759 = vsel %vm603, %v754, %v758
        %v761 = vshrl.u32 %v580, 16
        %v763 = vshll.u32 %v580, 16
        %v765 = vrot.slane %v763, 1
        %v766 = vor.u32 %v761, %v765
        %v768 = vshll.u32 %v598, 16
        %v770 = vrot.slane %v768, 1
        %v771 = vsel %vm603, %v766, %v770
        %v773 = vshrl.u32 %v581, 16
        %v775 = vshll.u32 %v581, 16
        %v777 = vrot.slane %v775, 1
        %v778 = vor.u32 %v773, %v777
        %v780 = vshll.u32 %v599, 16
        %v782 = vrot.slane %v780, 1
        %v783 = vsel %vm603, %v778, %v782
        %v785 = vshrl.u32 %v582, 16
        %v787 = vshll.u32 %v582, 16
        %v789 = vrot.slane %v787, 1
        %v790 = vor.u32 %v785, %v789
        %v792 = vshll.u32 %v600, 16
        %v794 = vrot.slane %v792, 1
        %v795 = vsel %vm603, %v790, %v794
        %796 = vrot.lane.b32.xlu0 %v615, 3
        %v797 = vpop.permute.xlu0 %796
        %798 = vrot.lane.b32.xlu0 %v627, 3
        %v799 = vpop.permute.xlu0 %798
        %800 = vrot.lane.b32.xlu0 %v639, 3
        %v801 = vpop.permute.xlu0 %800
        %802 = vrot.lane.b32.xlu0 %v651, 3
        %v803 = vpop.permute.xlu0 %802
        %804 = vrot.lane.b32.xlu0 %v663, 3
        %v805 = vpop.permute.xlu0 %804
        %806 = vrot.lane.b32.xlu0 %v675, 3
        %v807 = vpop.permute.xlu0 %806
        %808 = vrot.lane.b32.xlu0 %v687, 3
        %v809 = vpop.permute.xlu0 %808
        %810 = vrot.lane.b32.xlu0 %v699, 3
        %v811 = vpop.permute.xlu0 %810
        %812 = vrot.lane.b32.xlu0 %v711, 3
        %v813 = vpop.permute.xlu0 %812
        %814 = vrot.lane.b32.xlu0 %v723, 3
        %v815 = vpop.permute.xlu0 %814
        %816 = vrot.lane.b32.xlu0 %v735, 3
        %v817 = vpop.permute.xlu0 %816
        %818 = vrot.lane.b32.xlu0 %v747, 3
        %v819 = vpop.permute.xlu0 %818
        %820 = vrot.lane.b32.xlu0 %v759, 3
        %v821 = vpop.permute.xlu0 %820
        %822 = vrot.lane.b32.xlu0 %v771, 3
        %v823 = vpop.permute.xlu0 %822
        %824 = vrot.lane.b32.xlu0 %v783, 3
        %v825 = vpop.permute.xlu0 %824
        %826 = vrot.lane.b32.xlu0 %v795, 3
        %v827 = vpop.permute.xlu0 %826
        %vm860 = vcmask 1046528
        %v861 = vrot.slane %v567, 1
        %v862 = vrot.slane %v585, 1
        %v863 = vsel %vm860, %v861, %v862
        %v864 = vrot.slane %v568, 1
        %v865 = vrot.slane %v586, 1
        %v866 = vsel %vm860, %v864, %v865
        %v867 = vrot.slane %v569, 1
        %v868 = vrot.slane %v587, 1
        %v869 = vsel %vm860, %v867, %v868
        %v870 = vrot.slane %v570, 1
        %v871 = vrot.slane %v588, 1
        %v872 = vsel %vm860, %v870, %v871
        %v873 = vrot.slane %v571, 1
        %v874 = vrot.slane %v589, 1
        %v875 = vsel %vm860, %v873, %v874
        %v876 = vrot.slane %v572, 1
        %v877 = vrot.slane %v590, 1
        %v878 = vsel %vm860, %v876, %v877
        %v879 = vrot.slane %v573, 1
        %v880 = vrot.slane %v591, 1
        %v881 = vsel %vm860, %v879, %v880
        %v882 = vrot.slane %v574, 1
        %v883 = vrot.slane %v592, 1
        %v884 = vsel %vm860, %v882, %v883
        %v885 = vrot.slane %v575, 1
        %v886 = vrot.slane %v593, 1
        %v887 = vsel %vm860, %v885, %v886
        %v888 = vrot.slane %v576, 1
        %v889 = vrot.slane %v594, 1
        %v890 = vsel %vm860, %v888, %v889
        %v891 = vrot.slane %v577, 1
        %v892 = vrot.slane %v595, 1
        %v893 = vsel %vm860, %v891, %v892
        %v894 = vrot.slane %v578, 1
        %v895 = vrot.slane %v596, 1
        %v896 = vsel %vm860, %v894, %v895
        %v897 = vrot.slane %v579, 1
        %v898 = vrot.slane %v597, 1
        %v899 = vsel %vm860, %v897, %v898
        %v900 = vrot.slane %v580, 1
        %v901 = vrot.slane %v598, 1
        %v902 = vsel %vm860, %v900, %v901
        %v903 = vrot.slane %v581, 1
        %v904 = vrot.slane %v599, 1
        %v905 = vsel %vm860, %v903, %v904
        %v906 = vrot.slane %v582, 1
        %v907 = vrot.slane %v600, 1
        %v908 = vsel %vm860, %v906, %v907
        %909 = vrot.lane.b32.xlu0 %v863, 6
        %v910 = vpop.permute.xlu0 %909
        %911 = vrot.lane.b32.xlu0 %v866, 6
        %v912 = vpop.permute.xlu0 %911
        %913 = vrot.lane.b32.xlu0 %v869, 6
        %v914 = vpop.permute.xlu0 %913
        %915 = vrot.lane.b32.xlu0 %v872, 6
        %v916 = vpop.permute.xlu0 %915
        %917 = vrot.lane.b32.xlu0 %v875, 6
        %v918 = vpop.permute.xlu0 %917
        %919 = vrot.lane.b32.xlu0 %v878, 6
        %v920 = vpop.permute.xlu0 %919
        %921 = vrot.lane.b32.xlu0 %v881, 6
        %v922 = vpop.permute.xlu0 %921
        %923 = vrot.lane.b32.xlu0 %v884, 6
        %v924 = vpop.permute.xlu0 %923
        %925 = vrot.lane.b32.xlu0 %v887, 6
        %v926 = vpop.permute.xlu0 %925
        %927 = vrot.lane.b32.xlu0 %v890, 6
        %v928 = vpop.permute.xlu0 %927
        %929 = vrot.lane.b32.xlu0 %v893, 6
        %v930 = vpop.permute.xlu0 %929
        %931 = vrot.lane.b32.xlu0 %v896, 6
        %v932 = vpop.permute.xlu0 %931
        %933 = vrot.lane.b32.xlu0 %v899, 6
        %v934 = vpop.permute.xlu0 %933
        %935 = vrot.lane.b32.xlu0 %v902, 6
        %v936 = vpop.permute.xlu0 %935
        %937 = vrot.lane.b32.xlu0 %v905, 6
        %v938 = vpop.permute.xlu0 %937
        %939 = vrot.lane.b32.xlu0 %v908, 6
        %v940 = vpop.permute.xlu0 %939
        %942 = vrot.lane.b32.xlu0 %v568, 9
        %v943 = vpop.permute.xlu0 %942
        %944 = vrot.lane.b32.xlu0 %v569, 9
        %v945 = vpop.permute.xlu0 %944
        %946 = vrot.lane.b32.xlu0 %v570, 9
        %v947 = vpop.permute.xlu0 %946
        %948 = vrot.lane.b32.xlu0 %v571, 9
        %v949 = vpop.permute.xlu0 %948
        %950 = vrot.lane.b32.xlu0 %v572, 9
        %v951 = vpop.permute.xlu0 %950
        %952 = vrot.lane.b32.xlu0 %v573, 9
        %v953 = vpop.permute.xlu0 %952
        %954 = vrot.lane.b32.xlu0 %v574, 9
        %v955 = vpop.permute.xlu0 %954
        %956 = vrot.lane.b32.xlu0 %v575, 9
        %v957 = vpop.permute.xlu0 %956
        %958 = vrot.lane.b32.xlu0 %v576, 9
        %v959 = vpop.permute.xlu0 %958
        %960 = vrot.lane.b32.xlu0 %v577, 9
        %v961 = vpop.permute.xlu0 %960
        %962 = vrot.lane.b32.xlu0 %v578, 9
        %v963 = vpop.permute.xlu0 %962
        %964 = vrot.lane.b32.xlu0 %v579, 9
        %v965 = vpop.permute.xlu0 %964
        %966 = vrot.lane.b32.xlu0 %v580, 9
        %v967 = vpop.permute.xlu0 %966
        %968 = vrot.lane.b32.xlu0 %v581, 9
        %v969 = vpop.permute.xlu0 %968
        %970 = vrot.lane.b32.xlu0 %v582, 9
        %v971 = vpop.permute.xlu0 %970
        %972 = vrot.lane.b32.xlu0 %v583, 9
        %v973 = vpop.permute.xlu0 %972
        %v975 = vshrl.u32 %v583, 16
        %v977 = vshll.u32 %v583, 16
        %v979 = vrot.slane %v977, 1
        %v980 = vor.u32 %v975, %v979
        %v982 = vshll.u32 %v601, 16
        %v984 = vrot.slane %v982, 1
        %v985 = vsel %vm603, %v980, %v984
        %986 = vrot.lane.b32.xlu0 %v627, 12
        %v987 = vpop.permute.xlu0 %986
        %988 = vrot.lane.b32.xlu0 %v639, 12
        %v989 = vpop.permute.xlu0 %988
        %990 = vrot.lane.b32.xlu0 %v651, 12
        %v991 = vpop.permute.xlu0 %990
        %992 = vrot.lane.b32.xlu0 %v663, 12
        %v993 = vpop.permute.xlu0 %992
        %994 = vrot.lane.b32.xlu0 %v675, 12
        %v995 = vpop.permute.xlu0 %994
        %996 = vrot.lane.b32.xlu0 %v687, 12
        %v997 = vpop.permute.xlu0 %996
        %998 = vrot.lane.b32.xlu0 %v699, 12
        %v999 = vpop.permute.xlu0 %998
        %1000 = vrot.lane.b32.xlu0 %v711, 12
        %v1001 = vpop.permute.xlu0 %1000
        %1002 = vrot.lane.b32.xlu0 %v723, 12
        %v1003 = vpop.permute.xlu0 %1002
        %1004 = vrot.lane.b32.xlu0 %v735, 12
        %v1005 = vpop.permute.xlu0 %1004
        %1006 = vrot.lane.b32.xlu0 %v747, 12
        %v1007 = vpop.permute.xlu0 %1006
        %1008 = vrot.lane.b32.xlu0 %v759, 12
        %v1009 = vpop.permute.xlu0 %1008
        %1010 = vrot.lane.b32.xlu0 %v771, 12
        %v1011 = vpop.permute.xlu0 %1010
        %1012 = vrot.lane.b32.xlu0 %v783, 12
        %v1013 = vpop.permute.xlu0 %1012
        %1014 = vrot.lane.b32.xlu0 %v795, 12
        %v1015 = vpop.permute.xlu0 %1014
        %1016 = vrot.lane.b32.xlu0 %v985, 12
        %v1017 = vpop.permute.xlu0 %1016
        %v1019 = vrot.slane %v583, 1
        %v1020 = vrot.slane %v601, 1
        %v1021 = vsel %vm860, %v1019, %v1020
        %1022 = vrot.lane.b32.xlu0 %v866, 15
        %v1023 = vpop.permute.xlu0 %1022
        %1024 = vrot.lane.b32.xlu0 %v869, 15
        %v1025 = vpop.permute.xlu0 %1024
        %1026 = vrot.lane.b32.xlu0 %v872, 15
        %v1027 = vpop.permute.xlu0 %1026
        %1028 = vrot.lane.b32.xlu0 %v875, 15
        %v1029 = vpop.permute.xlu0 %1028
        %1030 = vrot.lane.b32.xlu0 %v878, 15
        %v1031 = vpop.permute.xlu0 %1030
        %1032 = vrot.lane.b32.xlu0 %v881, 15
        %v1033 = vpop.permute.xlu0 %1032
        %1034 = vrot.lane.b32.xlu0 %v884, 15
        %v1035 = vpop.permute.xlu0 %1034
        %1036 = vrot.lane.b32.xlu0 %v887, 15
        %v1037 = vpop.permute.xlu0 %1036
        %1038 = vrot.lane.b32.xlu0 %v890, 15
        %v1039 = vpop.permute.xlu0 %1038
        %1040 = vrot.lane.b32.xlu0 %v893, 15
        %v1041 = vpop.permute.xlu0 %1040
        %1042 = vrot.lane.b32.xlu0 %v896, 15
        %v1043 = vpop.permute.xlu0 %1042
        %1044 = vrot.lane.b32.xlu0 %v899, 15
        %v1045 = vpop.permute.xlu0 %1044
        %1046 = vrot.lane.b32.xlu0 %v902, 15
        %v1047 = vpop.permute.xlu0 %1046
        %1048 = vrot.lane.b32.xlu0 %v905, 15
        %v1049 = vpop.permute.xlu0 %1048
        %1050 = vrot.lane.b32.xlu0 %v908, 15
        %v1051 = vpop.permute.xlu0 %1050
        %1052 = vrot.lane.b32.xlu0 %v1021, 15
        %v1053 = vpop.permute.xlu0 %1052
        %1055 = vrot.lane.b32.xlu0 %v569, 18
        %v1056 = vpop.permute.xlu0 %1055
        %1057 = vrot.lane.b32.xlu0 %v570, 18
        %v1058 = vpop.permute.xlu0 %1057
        %1059 = vrot.lane.b32.xlu0 %v571, 18
        %v1060 = vpop.permute.xlu0 %1059
        %1061 = vrot.lane.b32.xlu0 %v572, 18
        %v1062 = vpop.permute.xlu0 %1061
        %1063 = vrot.lane.b32.xlu0 %v573, 18
        %v1064 = vpop.permute.xlu0 %1063
        %1065 = vrot.lane.b32.xlu0 %v574, 18
        %v1066 = vpop.permute.xlu0 %1065
        %1067 = vrot.lane.b32.xlu0 %v575, 18
        %v1068 = vpop.permute.xlu0 %1067
        %1069 = vrot.lane.b32.xlu0 %v576, 18
        %v1070 = vpop.permute.xlu0 %1069
        %1071 = vrot.lane.b32.xlu0 %v577, 18
        %v1072 = vpop.permute.xlu0 %1071
        %1073 = vrot.lane.b32.xlu0 %v578, 18
        %v1074 = vpop.permute.xlu0 %1073
        %1075 = vrot.lane.b32.xlu0 %v579, 18
        %v1076 = vpop.permute.xlu0 %1075
        %1077 = vrot.lane.b32.xlu0 %v580, 18
        %v1078 = vpop.permute.xlu0 %1077
        %1079 = vrot.lane.b32.xlu0 %v581, 18
        %v1080 = vpop.permute.xlu0 %1079
        %1081 = vrot.lane.b32.xlu0 %v582, 18
        %v1082 = vpop.permute.xlu0 %1081
        %1083 = vrot.lane.b32.xlu0 %v583, 18
        %v1084 = vpop.permute.xlu0 %1083
        %1085 = vrot.lane.b32.xlu0 %v584, 18
        %v1086 = vpop.permute.xlu0 %1085
        %v1088 = vshrl.u32 %v584, 16
        %v1090 = vshll.u32 %v584, 16
        %v1092 = vrot.slane %v1090, 1
        %v1093 = vor.u32 %v1088, %v1092
        %v1095 = vshll.u32 %v602, 16
        %v1097 = vrot.slane %v1095, 1
        %v1098 = vsel %vm603, %v1093, %v1097
        %1099 = vrot.lane.b32.xlu0 %v639, 21
        %v1100 = vpop.permute.xlu0 %1099
        %1101 = vrot.lane.b32.xlu0 %v651, 21
        %v1102 = vpop.permute.xlu0 %1101
        %1103 = vrot.lane.b32.xlu0 %v663, 21
        %v1104 = vpop.permute.xlu0 %1103
        %1105 = vrot.lane.b32.xlu0 %v675, 21
        %v1106 = vpop.permute.xlu0 %1105
        %1107 = vrot.lane.b32.xlu0 %v687, 21
        %v1108 = vpop.permute.xlu0 %1107
        %1109 = vrot.lane.b32.xlu0 %v699, 21
        %v1110 = vpop.permute.xlu0 %1109
        %1111 = vrot.lane.b32.xlu0 %v711, 21
        %v1112 = vpop.permute.xlu0 %1111
        %1113 = vrot.lane.b32.xlu0 %v723, 21
        %v1114 = vpop.permute.xlu0 %1113
        %1115 = vrot.lane.b32.xlu0 %v735, 21
        %v1116 = vpop.permute.xlu0 %1115
        %1117 = vrot.lane.b32.xlu0 %v747, 21
        %v1118 = vpop.permute.xlu0 %1117
        %1119 = vrot.lane.b32.xlu0 %v759, 21
        %v1120 = vpop.permute.xlu0 %1119
        %1121 = vrot.lane.b32.xlu0 %v771, 21
        %v1122 = vpop.permute.xlu0 %1121
        %1123 = vrot.lane.b32.xlu0 %v783, 21
        %v1124 = vpop.permute.xlu0 %1123
        %1125 = vrot.lane.b32.xlu0 %v795, 21
        %v1126 = vpop.permute.xlu0 %1125
        %1127 = vrot.lane.b32.xlu0 %v985, 21
        %v1128 = vpop.permute.xlu0 %1127
        %1129 = vrot.lane.b32.xlu0 %v1098, 21
        %v1130 = vpop.permute.xlu0 %1129
        %v1132 = vrot.slane %v584, 1
        %v1133 = vrot.slane %v602, 1
        %v1134 = vsel %vm860, %v1132, %v1133
        %1135 = vrot.lane.b32.xlu0 %v869, 24
        %v1136 = vpop.permute.xlu0 %1135
        %1137 = vrot.lane.b32.xlu0 %v872, 24
        %v1138 = vpop.permute.xlu0 %1137
        %1139 = vrot.lane.b32.xlu0 %v875, 24
        %v1140 = vpop.permute.xlu0 %1139
        %1141 = vrot.lane.b32.xlu0 %v878, 24
        %v1142 = vpop.permute.xlu0 %1141
        %1143 = vrot.lane.b32.xlu0 %v881, 24
        %v1144 = vpop.permute.xlu0 %1143
        %1145 = vrot.lane.b32.xlu0 %v884, 24
        %v1146 = vpop.permute.xlu0 %1145
        %1147 = vrot.lane.b32.xlu0 %v887, 24
        %v1148 = vpop.permute.xlu0 %1147
        %1149 = vrot.lane.b32.xlu0 %v890, 24
        %v1150 = vpop.permute.xlu0 %1149
        %1151 = vrot.lane.b32.xlu0 %v893, 24
        %v1152 = vpop.permute.xlu0 %1151
        %1153 = vrot.lane.b32.xlu0 %v896, 24
        %v1154 = vpop.permute.xlu0 %1153
        %1155 = vrot.lane.b32.xlu0 %v899, 24
        %v1156 = vpop.permute.xlu0 %1155
        %1157 = vrot.lane.b32.xlu0 %v902, 24
        %v1158 = vpop.permute.xlu0 %1157
        %1159 = vrot.lane.b32.xlu0 %v905, 24
        %v1160 = vpop.permute.xlu0 %1159
        %1161 = vrot.lane.b32.xlu0 %v908, 24
        %v1162 = vpop.permute.xlu0 %1161
        %1163 = vrot.lane.b32.xlu0 %v1021, 24
        %v1164 = vpop.permute.xlu0 %1163
        %1165 = vrot.lane.b32.xlu0 %v1134, 24
        %v1166 = vpop.permute.xlu0 %1165
        %vm1167 = vcmask 23552
        %v1169 = vsel %vm1167, %v567, %v797
        %v1171 = vsel %vm1167, %v568, %v799
        %v1173 = vsel %vm1167, %v569, %v801
        %v1175 = vsel %vm1167, %v570, %v803
        %v1177 = vsel %vm1167, %v571, %v805
        %v1179 = vsel %vm1167, %v572, %v807
        %v1181 = vsel %vm1167, %v573, %v809
        %v1183 = vsel %vm1167, %v574, %v811
        %v1185 = vsel %vm1167, %v575, %v813
        %v1187 = vsel %vm1167, %v576, %v815
        %v1189 = vsel %vm1167, %v577, %v817
        %v1191 = vsel %vm1167, %v578, %v819
        %v1193 = vsel %vm1167, %v579, %v821
        %v1195 = vsel %vm1167, %v580, %v823
        %v1197 = vsel %vm1167, %v581, %v825
        %v1199 = vsel %vm1167, %v582, %v827
        %vm1200 = vcmask 48128
        %v1202 = vsel %vm1200, %v1169, %v910
        %v1204 = vsel %vm1200, %v1171, %v912
        %v1206 = vsel %vm1200, %v1173, %v914
        %v1208 = vsel %vm1200, %v1175, %v916
        %v1210 = vsel %vm1200, %v1177, %v918
        %v1212 = vsel %vm1200, %v1179, %v920
        %v1214 = vsel %vm1200, %v1181, %v922
        %v1216 = vsel %vm1200, %v1183, %v924
        %v1218 = vsel %vm1200, %v1185, %v926
        %v1220 = vsel %vm1200, %v1187, %v928
        %v1222 = vsel %vm1200, %v1189, %v930
        %v1224 = vsel %vm1200, %v1191, %v932
        %v1226 = vsel %vm1200, %v1193, %v934
        %v1228 = vsel %vm1200, %v1195, %v936
        %v1230 = vsel %vm1200, %v1197, %v938
        %v1232 = vsel %vm1200, %v1199, %v940
        %vm1233 = vcmask 72704
        %v1235 = vsel %vm1233, %v1202, %v943
        %v1237 = vsel %vm1233, %v1204, %v945
        %v1239 = vsel %vm1233, %v1206, %v947
        %v1241 = vsel %vm1233, %v1208, %v949
        %v1243 = vsel %vm1233, %v1210, %v951
        %v1245 = vsel %vm1233, %v1212, %v953
        %v1247 = vsel %vm1233, %v1214, %v955
        %v1249 = vsel %vm1233, %v1216, %v957
        %v1251 = vsel %vm1233, %v1218, %v959
        %v1253 = vsel %vm1233, %v1220, %v961
        %v1255 = vsel %vm1233, %v1222, %v963
        %v1257 = vsel %vm1233, %v1224, %v965
        %v1259 = vsel %vm1233, %v1226, %v967
        %v1261 = vsel %vm1233, %v1228, %v969
        %v1263 = vsel %vm1233, %v1230, %v971
        %v1265 = vsel %vm1233, %v1232, %v973
        %vm1266 = vcmask 97280
        %v1268 = vsel %vm1266, %v1235, %v987
        %v1270 = vsel %vm1266, %v1237, %v989
        %v1272 = vsel %vm1266, %v1239, %v991
        %v1274 = vsel %vm1266, %v1241, %v993
        %v1276 = vsel %vm1266, %v1243, %v995
        %v1278 = vsel %vm1266, %v1245, %v997
        %v1280 = vsel %vm1266, %v1247, %v999
        %v1282 = vsel %vm1266, %v1249, %v1001
        %v1284 = vsel %vm1266, %v1251, %v1003
        %v1286 = vsel %vm1266, %v1253, %v1005
        %v1288 = vsel %vm1266, %v1255, %v1007
        %v1290 = vsel %vm1266, %v1257, %v1009
        %v1292 = vsel %vm1266, %v1259, %v1011
        %v1294 = vsel %vm1266, %v1261, %v1013
        %v1296 = vsel %vm1266, %v1263, %v1015
        %v1298 = vsel %vm1266, %v1265, %v1017
        %vm1299 = vcmask 121856
        %v1301 = vsel %vm1299, %v1268, %v1023
        %v1303 = vsel %vm1299, %v1270, %v1025
        %v1305 = vsel %vm1299, %v1272, %v1027
        %v1307 = vsel %vm1299, %v1274, %v1029
        %v1309 = vsel %vm1299, %v1276, %v1031
        %v1311 = vsel %vm1299, %v1278, %v1033
        %v1313 = vsel %vm1299, %v1280, %v1035
        %v1315 = vsel %vm1299, %v1282, %v1037
        %v1317 = vsel %vm1299, %v1284, %v1039
        %v1319 = vsel %vm1299, %v1286, %v1041
        %v1321 = vsel %vm1299, %v1288, %v1043
        %v1323 = vsel %vm1299, %v1290, %v1045
        %v1325 = vsel %vm1299, %v1292, %v1047
        %v1327 = vsel %vm1299, %v1294, %v1049
        %v1329 = vsel %vm1299, %v1296, %v1051
        %v1331 = vsel %vm1299, %v1298, %v1053
        %vm1332 = vcmask 146432
        %v1334 = vsel %vm1332, %v1301, %v1056
        %v1336 = vsel %vm1332, %v1303, %v1058
        %v1338 = vsel %vm1332, %v1305, %v1060
        %v1340 = vsel %vm1332, %v1307, %v1062
        %v1342 = vsel %vm1332, %v1309, %v1064
        %v1344 = vsel %vm1332, %v1311, %v1066
        %v1346 = vsel %vm1332, %v1313, %v1068
        %v1348 = vsel %vm1332, %v1315, %v1070
        %v1350 = vsel %vm1332, %v1317, %v1072
        %v1352 = vsel %vm1332, %v1319, %v1074
        %v1354 = vsel %vm1332, %v1321, %v1076
        %v1356 = vsel %vm1332, %v1323, %v1078
        %v1358 = vsel %vm1332, %v1325, %v1080
        %v1360 = vsel %vm1332, %v1327, %v1082
        %v1362 = vsel %vm1332, %v1329, %v1084
        %v1364 = vsel %vm1332, %v1331, %v1086
        %vm1365 = vcmask 171008
        %v1367 = vsel %vm1365, %v1334, %v1100
        %v1369 = vsel %vm1365, %v1336, %v1102
        %v1371 = vsel %vm1365, %v1338, %v1104
        %v1373 = vsel %vm1365, %v1340, %v1106
        %v1375 = vsel %vm1365, %v1342, %v1108
        %v1377 = vsel %vm1365, %v1344, %v1110
        %v1379 = vsel %vm1365, %v1346, %v1112
        %v1381 = vsel %vm1365, %v1348, %v1114
        %v1383 = vsel %vm1365, %v1350, %v1116
        %v1385 = vsel %vm1365, %v1352, %v1118
        %v1387 = vsel %vm1365, %v1354, %v1120
        %v1389 = vsel %vm1365, %v1356, %v1122
        %v1391 = vsel %vm1365, %v1358, %v1124
        %v1393 = vsel %vm1365, %v1360, %v1126
        %v1395 = vsel %vm1365, %v1362, %v1128
        %v1397 = vsel %vm1365, %v1364, %v1130
        %vm1398 = vcmask 195584
        %v1400 = vsel %vm1398, %v1367, %v1136
        %v1402 = vsel %vm1398, %v1369, %v1138
        %v1404 = vsel %vm1398, %v1371, %v1140
        %v1406 = vsel %vm1398, %v1373, %v1142
        %v1408 = vsel %vm1398, %v1375, %v1144
        %v1410 = vsel %vm1398, %v1377, %v1146
        %v1412 = vsel %vm1398, %v1379, %v1148
        %v1414 = vsel %vm1398, %v1381, %v1150
        %v1416 = vsel %vm1398, %v1383, %v1152
        %v1418 = vsel %vm1398, %v1385, %v1154
        %v1420 = vsel %vm1398, %v1387, %v1156
        %v1422 = vsel %vm1398, %v1389, %v1158
        %v1424 = vsel %vm1398, %v1391, %v1160
        %v1426 = vsel %vm1398, %v1393, %v1162
        %v1428 = vsel %vm1398, %v1395, %v1164
        %v1430 = vsel %vm1398, %v1397, %v1166
        %v1431 = vld [vmem:[%s3] sm:$0xf]
        %v1432 = vld [vmem:[%s3 + $0x4] sm:$0xf]
        %v1433 = vld [vmem:[%s3 + $0x8] sm:$0xf]
        %v1434 = vld [vmem:[%s3 + $0xc] sm:$0x3]
        %v1435 = vld [vmem:[%s4] sm:$0x1]
        %v1437 = vlaneseq
        %v1438 = vshrl.u32 %v1437, 7
        %v1439 = vsub.s32 0, %v1438
        %v1440 = vrot.slane %v1435, %v1439
        %v1446 = vunpack.c.l.b16 %v1431
        %v1447 = vunpack.c.l.b16 %v1432
        %v1448 = vunpack.c.l.b16 %v1433
        %v1449 = vunpack.c.l.b16 %v1434
        %v1450 = vpack.c.b16 %v1447, %v1446
        %v1451 = vpack.c.b16 %v1449, %v1448
        %vm1453 = vcmask 220160
        %v1454 = vsel %vm1453, %v1400, 0
        %v1456 = vsel %vm1453, %v1402, 0
        %v1458 = vsel %vm1453, %v1404, 0
        %v1460 = vsel %vm1453, %v1406, 0
        %v1462 = vsel %vm1453, %v1408, 0
        %v1464 = vsel %vm1453, %v1410, 0
        %v1466 = vsel %vm1453, %v1412, 0
        %v1468 = vsel %vm1453, %v1414, 0
        %v1470 = vsel %vm1453, %v1416, 0
        %v1472 = vsel %vm1453, %v1418, 0
        %v1474 = vsel %vm1453, %v1420, 0
        %v1476 = vsel %vm1453, %v1422, 0
        %v1478 = vsel %vm1453, %v1424, 0
        %v1480 = vsel %vm1453, %v1426, 0
        %v1482 = vsel %vm1453, %v1428, 0
        %v1484 = vsel %vm1453, %v1430, 0
        %vm1486 = vcmask 1044480
        %vm1487 = vcmask 1045504
        %v1488 = vsel %vm1486, 4294967295, 65535
        %v1489 = vsel %vm1487, %v1488, 0
        %v1491 = vand.u32 %v1451, %v1489
        %1493 = vmatprep.subr.bf16.mxu0 0
        %1494 = vmatpush1.bf16.msra.mxu0 %v1450
        %1495 = vmatprep.subr.bf16.mxu0 0
        %1496 = vmatpush1.bf16.msra.mxu0 %v1491
        %1497 = vmatprep.subr.bf16.mxu0 0
        %1498 = vmatpush1.bf16.msra.mxu0 0
        %1499 = vmatprep.subr.bf16.mxu0 0
        %1500 = vmatpush1.bf16.msra.mxu0 0
        %1501 = vmatprep.subr.bf16.mxu0 0
        %1502 = vmatpush1.bf16.msra.mxu0 0
        %1503 = vmatprep.subr.bf16.mxu0 0
        %1504 = vmatpush1.bf16.msra.mxu0 0
        %1505 = vmatprep.subr.bf16.mxu0 0
        %1506 = vmatpush1.bf16.msra.mxu0 0
        %1507 = vmatprep.subr.bf16.mxu0 0
        %1508 = vmatpush1.bf16.msra.mxu0 0
        %1509 = vmatprep.subr.bf16.mxu0 0
        %1510 = vmatpush1.bf16.msra.mxu0 0
        %1511 = vmatprep.subr.bf16.mxu0 0
        %1512 = vmatpush1.bf16.msra.mxu0 0
        %1513 = vmatprep.subr.bf16.mxu0 0
        %1514 = vmatpush1.bf16.msra.mxu0 0
        %1515 = vmatprep.subr.bf16.mxu0 0
        %1516 = vmatpush1.bf16.msra.mxu0 0
        %1517 = vmatprep.subr.bf16.mxu0 0
        %1518 = vmatpush1.bf16.msra.mxu0 0
        %1519 = vmatprep.subr.bf16.mxu0 0
        %1520 = vmatpush1.bf16.msra.mxu0 0
        %1521 = vmatprep.subr.bf16.mxu0 0
        %1522 = vmatpush1.bf16.msra.mxu0 0
        %1523 = vmatprep.subr.bf16.mxu0 0
        %1524 = vmatpush1.bf16.msra.mxu0 0
        %1525 = vmatprep.mubr.bf16.mxu0 0
        %1526 = vmatmul.mubr.bf16.gmra.mrb[0].mxu0 %v1454
        %v1527 = vpop.f32.mrb[0].mxu0
        %v1528 = vadd.f32 %v1440, %v1527
        %v1529 = vpop.f32.mrb[0].mxu0
        %v1530 = vpop.f32.mrb[0].mxu0
        %v1531 = vadd.f32 %v1440, %v1530
        %v1532 = vpop.f32.mrb[0].mxu0
        %1533 = vmatprep.mubr.bf16.mxu0 0
        %1534 = vmatmul.mubr.bf16.gmra.mrb[0].mxu0 %v1456
        %v1535 = vpop.f32.mrb[0].mxu0
        %v1536 = vadd.f32 %v1440, %v1535
        %v1537 = vpop.f32.mrb[0].mxu0
        %v1538 = vpop.f32.mrb[0].mxu0
        %v1539 = vadd.f32 %v1440, %v1538
        %v1540 = vpop.f32.mrb[0].mxu0
        %1541 = vmatprep.mubr.bf16.mxu0 0
        %1542 = vmatmul.mubr.bf16.gmra.mrb[0].mxu0 %v1458
        %v1543 = vpop.f32.mrb[0].mxu0
        %v1544 = vadd.f32 %v1440, %v1543
        %v1545 = vpop.f32.mrb[0].mxu0
        %v1546 = vpop.f32.mrb[0].mxu0
        %v1547 = vadd.f32 %v1440, %v1546
        %v1548 = vpop.f32.mrb[0].mxu0
        %1549 = vmatprep.mubr.bf16.mxu0 0
        %1550 = vmatmul.mubr.bf16.gmra.mrb[0].mxu0 %v1460
        %v1551 = vpop.f32.mrb[0].mxu0
        %v1552 = vadd.f32 %v1440, %v1551
        %v1553 = vpop.f32.mrb[0].mxu0
        %v1554 = vpop.f32.mrb[0].mxu0
        %v1555 = vadd.f32 %v1440, %v1554
        %v1556 = vpop.f32.mrb[0].mxu0
        %1557 = vmatprep.mubr.bf16.mxu0 0
        %1558 = vmatmul.mubr.bf16.gmra.mrb[0].mxu0 %v1462
        %v1559 = vpop.f32.mrb[0].mxu0
        %v1560 = vadd.f32 %v1440, %v1559
        %v1561 = vpop.f32.mrb[0].mxu0
        %v1562 = vpop.f32.mrb[0].mxu0
        %v1563 = vadd.f32 %v1440, %v1562
        %v1564 = vpop.f32.mrb[0].mxu0
        %1565 = vmatprep.mubr.bf16.mxu0 0
        %1566 = vmatmul.mubr.bf16.gmra.mrb[0].mxu0 %v1464
        %v1567 = vpop.f32.mrb[0].mxu0
        %v1568 = vadd.f32 %v1440, %v1567
        %v1569 = vpop.f32.mrb[0].mxu0
        %v1570 = vpop.f32.mrb[0].mxu0
        %v1571 = vadd.f32 %v1440, %v1570
        %v1572 = vpop.f32.mrb[0].mxu0
        %1573 = vmatprep.mubr.bf16.mxu0 0
        %1574 = vmatmul.mubr.bf16.gmra.mrb[0].mxu0 %v1466
        %v1575 = vpop.f32.mrb[0].mxu0
        %v1576 = vadd.f32 %v1440, %v1575
        %v1577 = vpop.f32.mrb[0].mxu0
        %v1578 = vpop.f32.mrb[0].mxu0
        %v1579 = vadd.f32 %v1440, %v1578
        %v1580 = vpop.f32.mrb[0].mxu0
        %1581 = vmatprep.mubr.bf16.mxu0 0
        %1582 = vmatmul.mubr.bf16.gmra.mrb[0].mxu0 %v1468
        %v1583 = vpop.f32.mrb[0].mxu0
        %v1584 = vadd.f32 %v1440, %v1583
        %v1585 = vpop.f32.mrb[0].mxu0
        %v1586 = vpop.f32.mrb[0].mxu0
        %v1587 = vadd.f32 %v1440, %v1586
        %v1588 = vpop.f32.mrb[0].mxu0
        %1589 = vmatprep.mubr.bf16.mxu0 0
        %1590 = vmatmul.mubr.bf16.gmra.mrb[0].mxu0 %v1470
        %v1591 = vpop.f32.mrb[0].mxu0
        %v1592 = vadd.f32 %v1440, %v1591
        %v1593 = vpop.f32.mrb[0].mxu0
        %v1594 = vpop.f32.mrb[0].mxu0
        %v1595 = vadd.f32 %v1440, %v1594
        %v1596 = vpop.f32.mrb[0].mxu0
        %1597 = vmatprep.mubr.bf16.mxu0 0
        %1598 = vmatmul.mubr.bf16.gmra.mrb[0].mxu0 %v1472
        %v1599 = vpop.f32.mrb[0].mxu0
        %v1600 = vadd.f32 %v1440, %v1599
        %v1601 = vpop.f32.mrb[0].mxu0
        %v1602 = vpop.f32.mrb[0].mxu0
        %v1603 = vadd.f32 %v1440, %v1602
        %v1604 = vpop.f32.mrb[0].mxu0
        %1605 = vmatprep.mubr.bf16.mxu0 0
        %1606 = vmatmul.mubr.bf16.gmra.mrb[0].mxu0 %v1474
        %v1607 = vpop.f32.mrb[0].mxu0
        %v1608 = vadd.f32 %v1440, %v1607
        %v1609 = vpop.f32.mrb[0].mxu0
        %v1610 = vpop.f32.mrb[0].mxu0
        %v1611 = vadd.f32 %v1440, %v1610
        %v1612 = vpop.f32.mrb[0].mxu0
        %1613 = vmatprep.mubr.bf16.mxu0 0
        %1614 = vmatmul.mubr.bf16.gmra.mrb[0].mxu0 %v1476
        %v1615 = vpop.f32.mrb[0].mxu0
        %v1616 = vadd.f32 %v1440, %v1615
        %v1617 = vpop.f32.mrb[0].mxu0
        %v1618 = vpop.f32.mrb[0].mxu0
        %v1619 = vadd.f32 %v1440, %v1618
        %v1620 = vpop.f32.mrb[0].mxu0
        %1621 = vmatprep.mubr.bf16.mxu0 0
        %1622 = vmatmul.mubr.bf16.gmra.mrb[0].mxu0 %v1478
        %v1623 = vpop.f32.mrb[0].mxu0
        %v1624 = vadd.f32 %v1440, %v1623
        %v1625 = vpop.f32.mrb[0].mxu0
        %v1626 = vpop.f32.mrb[0].mxu0
        %v1627 = vadd.f32 %v1440, %v1626
        %v1628 = vpop.f32.mrb[0].mxu0
        %1629 = vmatprep.mubr.bf16.mxu0 0
        %1630 = vmatmul.mubr.bf16.gmra.mrb[0].mxu0 %v1480
        %v1631 = vpop.f32.mrb[0].mxu0
        %v1632 = vadd.f32 %v1440, %v1631
        %v1633 = vpop.f32.mrb[0].mxu0
        %v1634 = vpop.f32.mrb[0].mxu0
        %v1635 = vadd.f32 %v1440, %v1634
        %v1636 = vpop.f32.mrb[0].mxu0
        %1637 = vmatprep.mubr.bf16.mxu0 0
        %1638 = vmatmul.mubr.bf16.gmra.mrb[0].mxu0 %v1482
        %v1639 = vpop.f32.mrb[0].mxu0
        %v1640 = vadd.f32 %v1440, %v1639
        %v1641 = vpop.f32.mrb[0].mxu0
        %v1642 = vpop.f32.mrb[0].mxu0
        %v1643 = vadd.f32 %v1440, %v1642
        %v1644 = vpop.f32.mrb[0].mxu0
        %1645 = vmatprep.mubr.bf16.mxu0 0
        %1646 = vmatmul.mubr.bf16.gmra.mrb[0].mxu0 %v1484
        %v1647 = vpop.f32.mrb[0].mxu0
        %v1648 = vadd.f32 %v1440, %v1647
        %v1649 = vpop.f32.mrb[0].mxu0
        %v1650 = vpop.f32.mrb[0].mxu0
        %v1651 = vadd.f32 %v1440, %v1650
        %v1652 = vpop.f32.mrb[0].mxu0
        %1653 = vdwg.mxu0
        %v1654 = vmax.f32 %v1528, 0.0
        %v1655 = vmax.f32 %v1531, 0.0
        %v1656 = vmax.f32 %v1536, 0.0
        %v1657 = vmax.f32 %v1539, 0.0
        %v1658 = vmax.f32 %v1544, 0.0
        %v1659 = vmax.f32 %v1547, 0.0
        %v1660 = vmax.f32 %v1552, 0.0
        %v1661 = vmax.f32 %v1555, 0.0
        %v1662 = vmax.f32 %v1560, 0.0
        %v1663 = vmax.f32 %v1563, 0.0
        %v1664 = vmax.f32 %v1568, 0.0
        %v1665 = vmax.f32 %v1571, 0.0
        %v1666 = vmax.f32 %v1576, 0.0
        %v1667 = vmax.f32 %v1579, 0.0
        %v1668 = vmax.f32 %v1584, 0.0
        %v1669 = vmax.f32 %v1587, 0.0
        %v1670 = vmax.f32 %v1592, 0.0
        %v1671 = vmax.f32 %v1595, 0.0
        %v1672 = vmax.f32 %v1600, 0.0
        %v1673 = vmax.f32 %v1603, 0.0
        %v1674 = vmax.f32 %v1608, 0.0
        %v1675 = vmax.f32 %v1611, 0.0
        %v1676 = vmax.f32 %v1616, 0.0
        %v1677 = vmax.f32 %v1619, 0.0
        %v1678 = vmax.f32 %v1624, 0.0
        %v1679 = vmax.f32 %v1627, 0.0
        %v1680 = vmax.f32 %v1632, 0.0
        %v1681 = vmax.f32 %v1635, 0.0
        %v1682 = vmax.f32 %v1640, 0.0
        %v1683 = vmax.f32 %v1643, 0.0
        %v1684 = vmax.f32 %v1648, 0.0
        %v1685 = vmax.f32 %v1651, 0.0
        %v1686 = vpack.c.bf16 %v1655, %v1654
        %v1687 = vpack.c.bf16 %v1657, %v1656
        %v1688 = vpack.c.bf16 %v1659, %v1658
        %v1689 = vpack.c.bf16 %v1661, %v1660
        %v1690 = vpack.c.bf16 %v1663, %v1662
        %v1691 = vpack.c.bf16 %v1665, %v1664
        %v1692 = vpack.c.bf16 %v1667, %v1666
        %v1693 = vpack.c.bf16 %v1669, %v1668
        %v1694 = vpack.c.bf16 %v1671, %v1670
        %v1695 = vpack.c.bf16 %v1673, %v1672
        %v1696 = vpack.c.bf16 %v1675, %v1674
        %v1697 = vpack.c.bf16 %v1677, %v1676
        %v1698 = vpack.c.bf16 %v1679, %v1678
        %v1699 = vpack.c.bf16 %v1681, %v1680
        %v1700 = vpack.c.bf16 %v1683, %v1682
        %v1701 = vpack.c.bf16 %v1685, %v1684
        %v1718 = vunpack.c.l.b16 %v1686
        %v1719 = vunpack.c.h.b16 %v1686
        %v1720 = vunpack.c.l.b16 %v1687
        %v1721 = vunpack.c.h.b16 %v1687
        %v1722 = vunpack.c.l.b16 %v1688
        %v1723 = vunpack.c.h.b16 %v1688
        %v1724 = vunpack.c.l.b16 %v1689
        %v1725 = vunpack.c.h.b16 %v1689
        %v1726 = vunpack.c.l.b16 %v1690
        %v1727 = vunpack.c.h.b16 %v1690
        %v1728 = vunpack.c.l.b16 %v1691
        %v1729 = vunpack.c.h.b16 %v1691
        %v1730 = vunpack.c.l.b16 %v1692
        %v1731 = vunpack.c.h.b16 %v1692
        %v1732 = vunpack.c.l.b16 %v1693
        %v1733 = vunpack.c.h.b16 %v1693
        %v1734 = vunpack.c.l.b16 %v1694
        %v1735 = vunpack.c.h.b16 %v1694
        %v1736 = vunpack.c.l.b16 %v1695
        %v1737 = vunpack.c.h.b16 %v1695
        %v1738 = vunpack.c.l.b16 %v1696
        %v1739 = vunpack.c.h.b16 %v1696
        %v1740 = vunpack.c.l.b16 %v1697
        %v1741 = vunpack.c.h.b16 %v1697
        %v1742 = vunpack.c.l.b16 %v1698
        %v1743 = vunpack.c.h.b16 %v1698
        %v1744 = vunpack.c.l.b16 %v1699
        %v1745 = vunpack.c.h.b16 %v1699
        %v1746 = vunpack.c.l.b16 %v1700
        %v1747 = vunpack.c.h.b16 %v1700
        %v1748 = vunpack.c.l.b16 %v1701
        %v1749 = vunpack.c.h.b16 %v1701
        %v1750 = vpack.c.b16 %v1718, %v1718
        %v1751 = vpack.c.b16 %v1719, %v1719
        %v1752 = vpack.c.b16 %v1720, %v1720
        %v1753 = vpack.c.b16 %v1721, %v1721
        %v1754 = vpack.c.b16 %v1722, %v1722
        %v1755 = vpack.c.b16 %v1723, %v1723
        %v1756 = vpack.c.b16 %v1724, %v1724
        %v1757 = vpack.c.b16 %v1725, %v1725
        %v1758 = vpack.c.b16 %v1726, %v1726
        %v1759 = vpack.c.b16 %v1727, %v1727
        %v1760 = vpack.c.b16 %v1728, %v1728
        %v1761 = vpack.c.b16 %v1729, %v1729
        %v1762 = vpack.c.b16 %v1730, %v1730
        %v1763 = vpack.c.b16 %v1731, %v1731
        %v1764 = vpack.c.b16 %v1732, %v1732
        %v1765 = vpack.c.b16 %v1733, %v1733
        %v1766 = vpack.c.b16 %v1734, %v1734
        %v1767 = vpack.c.b16 %v1735, %v1735
        %v1768 = vpack.c.b16 %v1736, %v1736
        %v1769 = vpack.c.b16 %v1737, %v1737
        %v1770 = vpack.c.b16 %v1738, %v1738
        %v1771 = vpack.c.b16 %v1739, %v1739
        %v1772 = vpack.c.b16 %v1740, %v1740
        %v1773 = vpack.c.b16 %v1741, %v1741
        %v1774 = vpack.c.b16 %v1742, %v1742
        %v1775 = vpack.c.b16 %v1743, %v1743
        %v1776 = vpack.c.b16 %v1744, %v1744
        %v1777 = vpack.c.b16 %v1745, %v1745
        %v1778 = vpack.c.b16 %v1746, %v1746
        %v1779 = vpack.c.b16 %v1747, %v1747
        %v1780 = vpack.c.b16 %v1748, %v1748
        %v1781 = vpack.c.b16 %v1749, %v1749
        %vm1814 = vcmask 519168
        %1815 = vst.msk [vmem:[%s231] sm:$0xf] %vm1814, %v1750
        %1816 = vst.msk [vmem:[%s231 + $0x4] sm:$0xf] %vm1814, %v1751
        %1817 = vst.msk [vmem:[%s231 + $0x8] sm:$0xf] %vm1814, %v1752
        %1818 = vst.msk [vmem:[%s231 + $0xc] sm:$0xf] %vm1814, %v1753
        %1819 = vst.msk [vmem:[%s231 + $0x10] sm:$0xf] %vm1814, %v1754
        %1820 = vst.msk [vmem:[%s231 + $0x14] sm:$0xf] %vm1814, %v1755
        %1821 = vst.msk [vmem:[%s231 + $0x18] sm:$0xf] %vm1814, %v1756
        %1822 = vst.msk [vmem:[%s231 + $0x1c] sm:$0xf] %vm1814, %v1757
        %1823 = vst.msk [vmem:[%s231 + $0x20] sm:$0xf] %vm1814, %v1758
        %1824 = vst.msk [vmem:[%s231 + $0x24] sm:$0xf] %vm1814, %v1759
        %1825 = vst.msk [vmem:[%s231 + $0x28] sm:$0xf] %vm1814, %v1760
        %1826 = vst.msk [vmem:[%s231 + $0x2c] sm:$0xf] %vm1814, %v1761
        %1827 = vst.msk [vmem:[%s231 + $0x30] sm:$0xf] %vm1814, %v1762
        %1828 = vst.msk [vmem:[%s231 + $0x34] sm:$0xf] %vm1814, %v1763
        %1829 = vst.msk [vmem:[%s231 + $0x38] sm:$0xf] %vm1814, %v1764
        %1830 = vst.msk [vmem:[%s231 + $0x3c] sm:$0xf] %vm1814, %v1765
        %1831 = vst.msk [vmem:[%s231 + $0x40] sm:$0xf] %vm1814, %v1766
        %1832 = vst.msk [vmem:[%s231 + $0x44] sm:$0xf] %vm1814, %v1767
        %1833 = vst.msk [vmem:[%s231 + $0x48] sm:$0xf] %vm1814, %v1768
        %1834 = vst.msk [vmem:[%s231 + $0x4c] sm:$0xf] %vm1814, %v1769
        %1835 = vst.msk [vmem:[%s231 + $0x50] sm:$0xf] %vm1814, %v1770
        %1836 = vst.msk [vmem:[%s231 + $0x54] sm:$0xf] %vm1814, %v1771
        %1837 = vst.msk [vmem:[%s231 + $0x58] sm:$0xf] %vm1814, %v1772
        %1838 = vst.msk [vmem:[%s231 + $0x5c] sm:$0xf] %vm1814, %v1773
        %1839 = vst.msk [vmem:[%s231 + $0x60] sm:$0xf] %vm1814, %v1774
        %1840 = vst.msk [vmem:[%s231 + $0x64] sm:$0xf] %vm1814, %v1775
        %1841 = vst.msk [vmem:[%s231 + $0x68] sm:$0xf] %vm1814, %v1776
        %1842 = vst.msk [vmem:[%s231 + $0x6c] sm:$0xf] %vm1814, %v1777
        %1843 = vst.msk [vmem:[%s231 + $0x70] sm:$0xf] %vm1814, %v1778
        %1844 = vst.msk [vmem:[%s231 + $0x74] sm:$0xf] %vm1814, %v1779
        %1845 = vst.msk [vmem:[%s231 + $0x78] sm:$0xf] %vm1814, %v1780
        %1846 = vst.msk [vmem:[%s231 + $0x7c] sm:$0xf] %vm1814, %v1781
        %s1847 = sand.u32 %s151, 1
        %s1848 = scalar_lea.sflag [#allocation3], %s1847
        %s1849 = sand.u32 %s151, 1
        %s1850 = smul.addr %s1849, 128
        %s1851 = scalar_lea.vmem [#allocation2], %s1850
        // Predicated region
        $region41: #{tpu_custom_call.1} parent=39 // pred_check
          %p1852 = pneg %p161
        $region42: #{tpu_custom_call.1} parent=39 // pred_check_branch
          %1854 = sbr.rel (%p1852) target = $region44
        $region43: #{tpu_custom_call.1} parent=39 // pred_region
          %s1855 = smul.u32 16, %s24
          %s1857 = ssub.s32 2048, 2048
          %1858 = vsyncadd %s1848, %s1857
          %s1859 = smul.addr %s1855, 2
          %s1860 = smul.addr %s23, 32
          %s1861 = sadd.s32 %s1859, %s1860
          %s1862 = smul.addr %s1861, 64
          %s1863 = scalar_lea.hbm %s5, %s1862
          %s1864 = sshll.u32 %s1851, 4
          %s1865 = int_to_ptr.vmem [resolvable:$true] %s1864
          %1870 = dma.vmem_to_hbm [thread:$0]  %s1865, 2048, %s1863, %s1848, 64, 64, 4
        $region44: #{tpu_custom_call.1} parent=39 // pred_fallthru
          _
      $region40: #{tpu_custom_call.1} parent=5 // pred_fallthru
        _
      %p1871 = scmp.le.s32.totalorder 2, %s14
      // Predicated region
      $region45: #{tpu_custom_call.1} parent=5 // pred_check
        %p1872 = pneg %p1871
      $region46: #{tpu_custom_call.1} parent=5 // pred_check_branch
        %1874 = sbr.rel (%p1872) target = $region48
      $region47: #{tpu_custom_call.1} parent=5 // pred_region
        %s1875 = ssub.s32 %s14, 2
        // Predicated region
        $region49: #{tpu_custom_call.1} parent=47 // pred_check
          %p1876 = pneg %p167
        $region50: #{tpu_custom_call.1} parent=47 // pred_check_branch
          %1878 = sbr.rel (%p1876) target = $region52
        $region51: #{tpu_custom_call.1} parent=47 // pred_region
          %s1879 = sand.u32 %s152, 1
          %s1880 = scalar_lea.sflag [#allocation3], %s1879
          %s1881 = sand.u32 %s152, 1
          %s1882 = smul.addr %s1881, 128
          %s1883 = scalar_lea.vmem [#allocation2], %s1882
          %1884 = dma.done %s1880, 2048
        $region52: #{tpu_custom_call.1} parent=47 // pred_fallthru
          _
      $region48: #{tpu_custom_call.1} parent=5 // pred_fallthru
        _
    $region6: #{tpu_custom_call.1} parent=1 // loop_footer
      %s18 = sadd.s32 1, %s14
    $region7: #{tpu_custom_call.1} parent=1 // loop_footer_branch
      %13 = sbr.rel target = $region3
    $region8: #{tpu_custom_call.1} parent=1 // loop_exit
      _
    %1885 = vsyncpa [#allocation3], 1
    %s1886 = scalar_lea.sflag [#allocation3], 1
    %1887 = vsyncpa %s1886, 1

</llo_original>
